<compile_context>
chip_gen: v7x
topology: tpu7x:2x2x1
jax: 0.10.0
libtpu: 0.0.40
codegen_flags: <defaults>
</compile_context>

<pallas_src>
import math
import functools

import jax
import jax.numpy as jnp
from jax.experimental import pallas as pl
from jax.experimental.pallas import tpu as pltpu


def _encoder_stack_kernel(
    x_ref, mask_ref,
    wqkv_ref, bqkv_ref, wo_ref, bo_ref,
    ln1_g_ref, ln1_b_ref, ln2_g_ref, ln2_b_ref,
    w1_ref, b1_ref, w2_ref, b2_ref,
    out_ref,
    *, num_heads: int, num_layers: int,
):
    # Per grid step: a block of `Bt` batch rows, full sequence & model dim.
    Bt, S, D = x_ref.shape
    H = num_heads
    hd = D // H

    x = x_ref[...].astype(jnp.float32).reshape(Bt * S, D)   # activations in f32
    mask = mask_ref[...].astype(jnp.float32)                # (Bt, S, S) additive

    # Load shared weights once (reused by every layer in the stack).
    wqkv = wqkv_ref[...]                                    # (D, 3D) bf16, Q-scaled
    bqkv = bqkv_ref[...].astype(jnp.float32)                # (1, 3D)
    wo = wo_ref[...]                                        # (D, D) bf16
    bo = bo_ref[...].astype(jnp.float32)
    w1 = w1_ref[...]                                        # (D, F) bf16
    b1 = b1_ref[...].astype(jnp.float32)
    w2 = w2_ref[...]                                        # (F, D) bf16
    b2 = b2_ref[...].astype(jnp.float32)
    g1 = ln1_g_ref[...].astype(jnp.float32)
    be1 = ln1_b_ref[...].astype(jnp.float32)
    g2 = ln2_g_ref[...].astype(jnp.float32)
    be2 = ln2_b_ref[...].astype(jnp.float32)

    def layer_norm(t, g, b):
        mu = jnp.mean(t, axis=-1, keepdims=True)
        var = jnp.mean((t - mu) ** 2, axis=-1, keepdims=True)
        return (t - mu) * jax.lax.rsqrt(var + 1e-5) * g + b

    y = x
    # Shared weights => statically unrolled layer loop; activation never leaves
    # the chip between layers.
    for _ in range(num_layers):
        # --- fused QKV projection (single wide MXU matmul, bf16 -> f32 acc) ---
        qkv = jnp.dot(y.astype(jnp.bfloat16), wqkv,
                      preferred_element_type=jnp.float32) + bqkv   # (Bt*S, 3D)
        q = qkv[:, 0 * D:1 * D].reshape(Bt, S, D)
        k = qkv[:, 1 * D:2 * D].reshape(Bt, S, D)
        v = qkv[:, 2 * D:3 * D].reshape(Bt, S, D)

        # --- multi-head self-attention (batched over Bt per head) ---
        head_outs = []
        for h in range(H):  # static, small head count
            qh = q[:, :, h * hd:(h + 1) * hd].astype(jnp.bfloat16)
            kh = k[:, :, h * hd:(h + 1) * hd].astype(jnp.bfloat16)
            vh = v[:, :, h * hd:(h + 1) * hd].astype(jnp.bfloat16)
            # 1/sqrt(hd) already folded into the Q weights.
            s = jnp.einsum('bqd,bkd->bqk', qh, kh,
                           preferred_element_type=jnp.float32) + mask
            s = s - jnp.max(s, axis=-1, keepdims=True)
            p = jnp.exp(s)
            p = p * pl.reciprocal(jnp.sum(p, axis=-1, keepdims=True), approx=True)
            head_outs.append(
                jnp.einsum('bqk,bkd->bqd', p.astype(jnp.bfloat16), vh,
                           preferred_element_type=jnp.float32))
        attn = jnp.concatenate(head_outs, axis=-1).reshape(Bt * S, D)
        attn = jnp.dot(attn.astype(jnp.bfloat16), wo,
                       preferred_element_type=jnp.float32) + bo

        # --- residual + LayerNorm 1 (f32) ---
        y = layer_norm(y + attn, g1, be1)

        # --- feed-forward (ReLU), bf16 matmuls / f32 accumulate ---
        ff = jnp.dot(y.astype(jnp.bfloat16), w1,
                     preferred_element_type=jnp.float32) + b1
        ff = jnp.maximum(ff, 0.0)
        ff = jnp.dot(ff.astype(jnp.bfloat16), w2,
                     preferred_element_type=jnp.float32) + b2

        # --- residual + LayerNorm 2 (f32) ---
        y = layer_norm(y + ff, g2, be2)

    out_ref[...] = y.reshape(Bt, S, D).astype(out_ref.dtype)


def _pick_block_b(B, S):
    """Batch rows per grid step: aim for block_b * S >= ~128 matmul rows while
    keeping >= 2 grid steps when possible (both v7x TensorCores busy)."""
    target = max(1, -(-128 // S))  # ceil(128 / S)
    cands = [d for d in range(1, B + 1)
             if B % d == 0 and d <= target and B // d >= 2]
    return max(cands) if cands else min(B, target)


def _prepare_params(params, num_heads):
    """Fuse QKV weights, fold the attention scale into Q, cast weights to bf16."""
    D = params["wq"].shape[0]
    hd = D // num_heads
    scale = 1.0 / math.sqrt(hd)
    wqkv = jnp.concatenate(
        [params["wq"] * scale, params["wk"], params["wv"]], axis=1
    ).astype(jnp.bfloat16)                                     # (D, 3D)
    bqkv = jnp.concatenate(
        [params["bq"] * scale, params["bk"], params["bv"]], axis=1
    ).astype(jnp.float32)                                      # (1, 3D)
    return {
        "wqkv": wqkv, "bqkv": bqkv,
        "wo": params["wo"].astype(jnp.bfloat16), "bo": params["bo"],
        "ln1_g": params["ln1_g"], "ln1_b": params["ln1_b"],
        "ln2_g": params["ln2_g"], "ln2_b": params["ln2_b"],
        "w1": params["w1"].astype(jnp.bfloat16), "b1": params["b1"],
        "w2": params["w2"].astype(jnp.bfloat16), "b2": params["b2"],
    }


def _encoder_stack_pallas(x, attention_mask, p, *, num_heads, num_layers,
                          block_b=None):
    B, S, D = x.shape
    F = p["w1"].shape[1]
    assert D % num_heads == 0, "d_model must be divisible by num_heads"
    if attention_mask is None:
        attention_mask = jnp.zeros((B, S, S), jnp.float32)

    Bt = _pick_block_b(B, S) if block_b is None else block_b
    assert B % Bt == 0

    def full_spec(shape):
        n = len(shape)
        return pl.BlockSpec(shape, lambda b, _n=n: (0,) * _n)

    in_specs = [
        pl.BlockSpec((Bt, S, D), lambda b: (b, 0, 0)),   # x
        pl.BlockSpec((Bt, S, S), lambda b: (b, 0, 0)),   # additive mask
        full_spec((D, 3 * D)), full_spec((1, 3 * D)),    # fused wqkv, bqkv
        full_spec((D, D)), full_spec((1, D)),            # wo, bo
        full_spec((1, D)), full_spec((1, D)),            # ln1 gamma, beta
        full_spec((1, D)), full_spec((1, D)),            # ln2 gamma, beta
        full_spec((D, F)), full_spec((1, F)),            # w1, b1
        full_spec((F, D)), full_spec((1, D)),            # w2, b2
    ]

    kernel = functools.partial(
        _encoder_stack_kernel, num_heads=num_heads, num_layers=num_layers)

    return pl.pallas_call(
        kernel,
        out_shape=jax.ShapeDtypeStruct((B, S, D), x.dtype),
        grid_spec=pltpu.PrefetchScalarGridSpec(
            num_scalar_prefetch=0,
            grid=(B // Bt,),
            in_specs=in_specs,
            out_specs=pl.BlockSpec((Bt, S, D), lambda b: (b, 0, 0)),
        ),
        compiler_params=pltpu.CompilerParams(
            dimension_semantics=("parallel",),
            vmem_limit_bytes=48 * 1024 * 1024,
        ),
    )(
        x, attention_mask,
        p["wqkv"], p["bqkv"], p["wo"], p["bo"],
        p["ln1_g"], p["ln1_b"], p["ln2_g"], p["ln2_b"],
        p["w1"], p["b1"], p["w2"], p["b2"],
    )


def transformer_encoder(x, attention_mask, params, *, num_layers, num_heads):
    # Same layer object repeated in the PyTorch ModuleList => shared weights;
    # the whole stack runs in one fused pallas_call.
    p = _prepare_params(params, num_heads)
    return _encoder_stack_pallas(
        x, attention_mask, p, num_heads=num_heads, num_layers=num_layers)


def make_params(key, d_model, d_ff):
    keys = jax.random.split(key, 8)
    scale = 0.02
    return {
        "wq": scale * jax.random.normal(keys[0], (d_model, d_model), jnp.float32),
        "wk": scale * jax.random.normal(keys[1], (d_model, d_model), jnp.float32),
        "wv": scale * jax.random.normal(keys[2], (d_model, d_model), jnp.float32),
        "wo": scale * jax.random.normal(keys[3], (d_model, d_model), jnp.float32),
        "bq": jnp.zeros((1, d_model), jnp.float32),
        "bk": jnp.zeros((1, d_model), jnp.float32),
        "bv": jnp.zeros((1, d_model), jnp.float32),
        "bo": jnp.zeros((1, d_model), jnp.float32),
        "ln1_g": jnp.ones((1, d_model), jnp.float32),
        "ln1_b": jnp.zeros((1, d_model), jnp.float32),
        "ln2_g": jnp.ones((1, d_model), jnp.float32),
        "ln2_b": jnp.zeros((1, d_model), jnp.float32),
        "w1": scale * jax.random.normal(keys[4], (d_model, d_ff), jnp.float32),
        "b1": jnp.zeros((1, d_ff), jnp.float32),
        "w2": scale * jax.random.normal(keys[5], (d_ff, d_model), jnp.float32),
        "b2": jnp.zeros((1, d_model), jnp.float32),
    }


if __name__ == "__main__":
    B, S, D, H, F_FF = 2, 8, 32, 4, 64
    NUM_LAYERS = 2

    root = jax.random.PRNGKey(0)
    k_x, k_p = jax.random.split(root)

    x = jax.random.normal(k_x, (B, S, D), jnp.float32)
    # Additive attention mask (zeros => no masking); shape (B, S, S).
    attention_mask = jnp.zeros((B, S, S), jnp.float32)

    params = make_params(k_p, D, F_FF)

    out = transformer_encoder(
        x, attention_mask, params, num_layers=NUM_LAYERS, num_heads=H
    )
    out = jax.block_until_ready(out)
    assert out.shape == (B, S, D)
    print("KERNEL_OK")
</pallas_src>

<mosaic_0001>
module attributes {stable_mosaic.version = 11 : i64} {
  func.func @_encoder_stack_kernel(%arg0: i32, %arg1: memref<1x8x32xf32, #tpu.memory_space<vmem>>, %arg2: memref<1x8x8xf32, #tpu.memory_space<vmem>>, %arg3: memref<32x96xbf16, #tpu.memory_space<vmem>>, %arg4: memref<1x96xf32, #tpu.memory_space<vmem>>, %arg5: memref<32x32xbf16, #tpu.memory_space<vmem>>, %arg6: memref<1x32xf32, #tpu.memory_space<vmem>>, %arg7: memref<1x32xf32, #tpu.memory_space<vmem>>, %arg8: memref<1x32xf32, #tpu.memory_space<vmem>>, %arg9: memref<1x32xf32, #tpu.memory_space<vmem>>, %arg10: memref<1x32xf32, #tpu.memory_space<vmem>>, %arg11: memref<32x64xbf16, #tpu.memory_space<vmem>>, %arg12: memref<1x64xf32, #tpu.memory_space<vmem>>, %arg13: memref<64x32xbf16, #tpu.memory_space<vmem>>, %arg14: memref<1x32xf32, #tpu.memory_space<vmem>>, %arg15: memref<1x8x32xf32, #tpu.memory_space<vmem>>) attributes {dimension_semantics = [#tpu.dimension_semantics<parallel>], iteration_bounds = array<i64: 2>, scalar_prefetch = 0 : i64, scratch_operands = 0 : i64, tpu.core_type = #tpu.core_type<tc>, window_params = [{transform_indices = @transform_0, window_bounds = array<i64: 1, 8, 32>}, {transform_indices = @transform_1, window_bounds = array<i64: 1, 8, 8>}, {pipeline_mode = #tpu.pipeline_mode<synchronous>, transform_indices = @transform_2, window_bounds = array<i64: 32, 96>}, {pipeline_mode = #tpu.pipeline_mode<synchronous>, transform_indices = @transform_3, window_bounds = array<i64: 1, 96>}, {pipeline_mode = #tpu.pipeline_mode<synchronous>, transform_indices = @transform_4, window_bounds = array<i64: 32, 32>}, {pipeline_mode = #tpu.pipeline_mode<synchronous>, transform_indices = @transform_5, window_bounds = array<i64: 1, 32>}, {pipeline_mode = #tpu.pipeline_mode<synchronous>, transform_indices = @transform_6, window_bounds = array<i64: 1, 32>}, {pipeline_mode = #tpu.pipeline_mode<synchronous>, transform_indices = @transform_7, window_bounds = array<i64: 1, 32>}, {pipeline_mode = #tpu.pipeline_mode<synchronous>, transform_indices = @transform_8, window_bounds = array<i64: 1, 32>}, {pipeline_mode = #tpu.pipeline_mode<synchronous>, transform_indices = @transform_9, window_bounds = array<i64: 1, 32>}, {pipeline_mode = #tpu.pipeline_mode<synchronous>, transform_indices = @transform_10, window_bounds = array<i64: 32, 64>}, {pipeline_mode = #tpu.pipeline_mode<synchronous>, transform_indices = @transform_11, window_bounds = array<i64: 1, 64>}, {pipeline_mode = #tpu.pipeline_mode<synchronous>, transform_indices = @transform_12, window_bounds = array<i64: 64, 32>}, {pipeline_mode = #tpu.pipeline_mode<synchronous>, transform_indices = @transform_13, window_bounds = array<i64: 1, 32>}, {transform_indices = @transform_14, window_bounds = array<i64: 1, 8, 32>}]} {
    %c0 = arith.constant 0 : index
    %c0_0 = arith.constant 0 : index
    %c0_1 = arith.constant 0 : index
    %0 = vector.load %arg1[%c0, %c0_0, %c0_1] : memref<1x8x32xf32, #tpu.memory_space<vmem>>, vector<1x8x32xf32>
    %1 = vector.shape_cast %0 : vector<1x8x32xf32> to vector<8x32xf32>
    %c0_2 = arith.constant 0 : index
    %c0_3 = arith.constant 0 : index
    %c0_4 = arith.constant 0 : index
    %2 = vector.load %arg2[%c0_2, %c0_3, %c0_4] : memref<1x8x8xf32, #tpu.memory_space<vmem>>, vector<1x8x8xf32>
    %c0_5 = arith.constant 0 : index
    %c0_6 = arith.constant 0 : index
    %3 = vector.load %arg3[%c0_5, %c0_6] : memref<32x96xbf16, #tpu.memory_space<vmem>>, vector<32x96xbf16>
    %c0_7 = arith.constant 0 : index
    %c0_8 = arith.constant 0 : index
    %4 = vector.load %arg4[%c0_7, %c0_8] : memref<1x96xf32, #tpu.memory_space<vmem>>, vector<1x96xf32>
    %c0_9 = arith.constant 0 : index
    %c0_10 = arith.constant 0 : index
    %5 = vector.load %arg5[%c0_9, %c0_10] : memref<32x32xbf16, #tpu.memory_space<vmem>>, vector<32x32xbf16>
    %c0_11 = arith.constant 0 : index
    %c0_12 = arith.constant 0 : index
    %6 = vector.load %arg6[%c0_11, %c0_12] : memref<1x32xf32, #tpu.memory_space<vmem>>, vector<1x32xf32>
    %c0_13 = arith.constant 0 : index
    %c0_14 = arith.constant 0 : index
    %7 = vector.load %arg11[%c0_13, %c0_14] : memref<32x64xbf16, #tpu.memory_space<vmem>>, vector<32x64xbf16>
    %c0_15 = arith.constant 0 : index
    %c0_16 = arith.constant 0 : index
    %8 = vector.load %arg12[%c0_15, %c0_16] : memref<1x64xf32, #tpu.memory_space<vmem>>, vector<1x64xf32>
    %c0_17 = arith.constant 0 : index
    %c0_18 = arith.constant 0 : index
    %9 = vector.load %arg13[%c0_17, %c0_18] : memref<64x32xbf16, #tpu.memory_space<vmem>>, vector<64x32xbf16>
    %c0_19 = arith.constant 0 : index
    %c0_20 = arith.constant 0 : index
    %10 = vector.load %arg14[%c0_19, %c0_20] : memref<1x32xf32, #tpu.memory_space<vmem>>, vector<1x32xf32>
    %c0_21 = arith.constant 0 : index
    %c0_22 = arith.constant 0 : index
    %11 = vector.load %arg7[%c0_21, %c0_22] : memref<1x32xf32, #tpu.memory_space<vmem>>, vector<1x32xf32>
    %c0_23 = arith.constant 0 : index
    %c0_24 = arith.constant 0 : index
    %12 = vector.load %arg8[%c0_23, %c0_24] : memref<1x32xf32, #tpu.memory_space<vmem>>, vector<1x32xf32>
    %c0_25 = arith.constant 0 : index
    %c0_26 = arith.constant 0 : index
    %13 = vector.load %arg9[%c0_25, %c0_26] : memref<1x32xf32, #tpu.memory_space<vmem>>, vector<1x32xf32>
    %c0_27 = arith.constant 0 : index
    %c0_28 = arith.constant 0 : index
    %14 = vector.load %arg10[%c0_27, %c0_28] : memref<1x32xf32, #tpu.memory_space<vmem>>, vector<1x32xf32>
    %15 = arith.truncf %1 : vector<8x32xf32> to vector<8x32xbf16>
    %cst = arith.constant dense<0.000000e+00> : vector<8x96xf32>
    %16 = tpu.matmul %15, %3, %cst {dimension_numbers = #tpu.dot_dimension_numbers<[1], [0], [0], [1], [0, 0, 1, 1], [], []>} : vector<8x32xbf16>, vector<32x96xbf16>, vector<8x96xf32> -> vector<8x96xf32>
    %17 = vector.broadcast %4 : vector<1x96xf32> to vector<8x96xf32>
    %18 = arith.addf %16, %17 : vector<8x96xf32>
    %19 = vector.extract_strided_slice %18 {offsets = [0, 0], sizes = [8, 32], strides = [1, 1]} : vector<8x96xf32> to vector<8x32xf32>
    %20 = vector.shape_cast %19 : vector<8x32xf32> to vector<1x8x32xf32>
    %21 = vector.extract_strided_slice %18 {offsets = [0, 32], sizes = [8, 32], strides = [1, 1]} : vector<8x96xf32> to vector<8x32xf32>
    %22 = vector.shape_cast %21 : vector<8x32xf32> to vector<1x8x32xf32>
    %23 = vector.extract_strided_slice %18 {offsets = [0, 64], sizes = [8, 32], strides = [1, 1]} : vector<8x96xf32> to vector<8x32xf32>
    %24 = vector.shape_cast %23 : vector<8x32xf32> to vector<1x8x32xf32>
    %25 = vector.extract_strided_slice %20 {offsets = [0, 0, 0], sizes = [1, 8, 8], strides = [1, 1, 1]} : vector<1x8x32xf32> to vector<1x8x8xf32>
    %26 = arith.truncf %25 : vector<1x8x8xf32> to vector<1x8x8xbf16>
    %27 = vector.extract_strided_slice %22 {offsets = [0, 0, 0], sizes = [1, 8, 8], strides = [1, 1, 1]} : vector<1x8x32xf32> to vector<1x8x8xf32>
    %28 = arith.truncf %27 : vector<1x8x8xf32> to vector<1x8x8xbf16>
    %29 = vector.extract_strided_slice %24 {offsets = [0, 0, 0], sizes = [1, 8, 8], strides = [1, 1, 1]} : vector<1x8x32xf32> to vector<1x8x8xf32>
    %30 = arith.truncf %29 : vector<1x8x8xf32> to vector<1x8x8xbf16>
    "tpu.trace_start"() <{level = 10 : i32, message = "bqd,bkd->bqk"}> : () -> ()
    %cst_29 = arith.constant dense<0.000000e+00> : vector<1x8x8xf32>
    %31 = tpu.matmul %26, %28, %cst_29 {dimension_numbers = #tpu.dot_dimension_numbers<[2], [2], [1], [1], [0, 0, 0, 1, 1, 1], [0], [0]>} : vector<1x8x8xbf16>, vector<1x8x8xbf16>, vector<1x8x8xf32> -> vector<1x8x8xf32>
    "tpu.trace_stop"() : () -> ()
    %32 = arith.addf %31, %2 : vector<1x8x8xf32>
    %cst_30 = arith.constant dense<0xFF800000> : vector<1x8xf32>
    %33 = vector.multi_reduction <maximumf>, %32, %cst_30 [2] : vector<1x8x8xf32> to vector<1x8xf32>
    %34 = vector.shape_cast %33 : vector<1x8xf32> to vector<1x8x1xf32>
    %35 = vector.broadcast %34 : vector<1x8x1xf32> to vector<1x8x8xf32>
    %36 = arith.subf %32, %35 : vector<1x8x8xf32>
    %37 = math.exp %36 : vector<1x8x8xf32>
    %cst_31 = arith.constant dense<0.000000e+00> : vector<1x8xf32>
    %38 = vector.multi_reduction <add>, %37, %cst_31 [2] : vector<1x8x8xf32> to vector<1x8xf32>
    %39 = vector.shape_cast %38 : vector<1x8xf32> to vector<1x8x1xf32>
    %40 = tpu.reciprocal %39 {approx = true} : vector<1x8x1xf32> -> vector<1x8x1xf32>
    %41 = vector.broadcast %40 : vector<1x8x1xf32> to vector<1x8x8xf32>
    %42 = arith.mulf %37, %41 : vector<1x8x8xf32>
    %43 = arith.truncf %42 : vector<1x8x8xf32> to vector<1x8x8xbf16>
    "tpu.trace_start"() <{level = 10 : i32, message = "bqk,bkd->bqd"}> : () -> ()
    %cst_32 = arith.constant dense<0.000000e+00> : vector<1x8x8xf32>
    %44 = tpu.matmul %43, %30, %cst_32 {dimension_numbers = #tpu.dot_dimension_numbers<[2], [1], [1], [2], [0, 0, 0, 1, 1, 2], [0], [0]>} : vector<1x8x8xbf16>, vector<1x8x8xbf16>, vector<1x8x8xf32> -> vector<1x8x8xf32>
    "tpu.trace_stop"() : () -> ()
    %45 = vector.extract_strided_slice %20 {offsets = [0, 0, 8], sizes = [1, 8, 8], strides = [1, 1, 1]} : vector<1x8x32xf32> to vector<1x8x8xf32>
    %46 = arith.truncf %45 : vector<1x8x8xf32> to vector<1x8x8xbf16>
    %47 = vector.extract_strided_slice %22 {offsets = [0, 0, 8], sizes = [1, 8, 8], strides = [1, 1, 1]} : vector<1x8x32xf32> to vector<1x8x8xf32>
    %48 = arith.truncf %47 : vector<1x8x8xf32> to vector<1x8x8xbf16>
    %49 = vector.extract_strided_slice %24 {offsets = [0, 0, 8], sizes = [1, 8, 8], strides = [1, 1, 1]} : vector<1x8x32xf32> to vector<1x8x8xf32>
    %50 = arith.truncf %49 : vector<1x8x8xf32> to vector<1x8x8xbf16>
    "tpu.trace_start"() <{level = 10 : i32, message = "bqd,bkd->bqk"}> : () -> ()
    %cst_33 = arith.constant dense<0.000000e+00> : vector<1x8x8xf32>
    %51 = tpu.matmul %46, %48, %cst_33 {dimension_numbers = #tpu.dot_dimension_numbers<[2], [2], [1], [1], [0, 0, 0, 1, 1, 1], [0], [0]>} : vector<1x8x8xbf16>, vector<1x8x8xbf16>, vector<1x8x8xf32> -> vector<1x8x8xf32>
    "tpu.trace_stop"() : () -> ()
    %52 = arith.addf %51, %2 : vector<1x8x8xf32>
    %cst_34 = arith.constant dense<0xFF800000> : vector<1x8xf32>
    %53 = vector.multi_reduction <maximumf>, %52, %cst_34 [2] : vector<1x8x8xf32> to vector<1x8xf32>
    %54 = vector.shape_cast %53 : vector<1x8xf32> to vector<1x8x1xf32>
    %55 = vector.broadcast %54 : vector<1x8x1xf32> to vector<1x8x8xf32>
    %56 = arith.subf %52, %55 : vector<1x8x8xf32>
    %57 = math.exp %56 : vector<1x8x8xf32>
    %cst_35 = arith.constant dense<0.000000e+00> : vector<1x8xf32>
    %58 = vector.multi_reduction <add>, %57, %cst_35 [2] : vector<1x8x8xf32> to vector<1x8xf32>
    %59 = vector.shape_cast %58 : vector<1x8xf32> to vector<1x8x1xf32>
    %60 = tpu.reciprocal %59 {approx = true} : vector<1x8x1xf32> -> vector<1x8x1xf32>
    %61 = vector.broadcast %60 : vector<1x8x1xf32> to vector<1x8x8xf32>
    %62 = arith.mulf %57, %61 : vector<1x8x8xf32>
    %63 = arith.truncf %62 : vector<1x8x8xf32> to vector<1x8x8xbf16>
    "tpu.trace_start"() <{level = 10 : i32, message = "bqk,bkd->bqd"}> : () -> ()
    %cst_36 = arith.constant dense<0.000000e+00> : vector<1x8x8xf32>
    %64 = tpu.matmul %63, %50, %cst_36 {dimension_numbers = #tpu.dot_dimension_numbers<[2], [1], [1], [2], [0, 0, 0, 1, 1, 2], [0], [0]>} : vector<1x8x8xbf16>, vector<1x8x8xbf16>, vector<1x8x8xf32> -> vector<1x8x8xf32>
    "tpu.trace_stop"() : () -> ()
    %65 = vector.extract_strided_slice %20 {offsets = [0, 0, 16], sizes = [1, 8, 8], strides = [1, 1, 1]} : vector<1x8x32xf32> to vector<1x8x8xf32>
    %66 = arith.truncf %65 : vector<1x8x8xf32> to vector<1x8x8xbf16>
    %67 = vector.extract_strided_slice %22 {offsets = [0, 0, 16], sizes = [1, 8, 8], strides = [1, 1, 1]} : vector<1x8x32xf32> to vector<1x8x8xf32>
    %68 = arith.truncf %67 : vector<1x8x8xf32> to vector<1x8x8xbf16>
    %69 = vector.extract_strided_slice %24 {offsets = [0, 0, 16], sizes = [1, 8, 8], strides = [1, 1, 1]} : vector<1x8x32xf32> to vector<1x8x8xf32>
    %70 = arith.truncf %69 : vector<1x8x8xf32> to vector<1x8x8xbf16>
    "tpu.trace_start"() <{level = 10 : i32, message = "bqd,bkd->bqk"}> : () -> ()
    %cst_37 = arith.constant dense<0.000000e+00> : vector<1x8x8xf32>
    %71 = tpu.matmul %66, %68, %cst_37 {dimension_numbers = #tpu.dot_dimension_numbers<[2], [2], [1], [1], [0, 0, 0, 1, 1, 1], [0], [0]>} : vector<1x8x8xbf16>, vector<1x8x8xbf16>, vector<1x8x8xf32> -> vector<1x8x8xf32>
    "tpu.trace_stop"() : () -> ()
    %72 = arith.addf %71, %2 : vector<1x8x8xf32>
    %cst_38 = arith.constant dense<0xFF800000> : vector<1x8xf32>
    %73 = vector.multi_reduction <maximumf>, %72, %cst_38 [2] : vector<1x8x8xf32> to vector<1x8xf32>
    %74 = vector.shape_cast %73 : vector<1x8xf32> to vector<1x8x1xf32>
    %75 = vector.broadcast %74 : vector<1x8x1xf32> to vector<1x8x8xf32>
    %76 = arith.subf %72, %75 : vector<1x8x8xf32>
    %77 = math.exp %76 : vector<1x8x8xf32>
    %cst_39 = arith.constant dense<0.000000e+00> : vector<1x8xf32>
    %78 = vector.multi_reduction <add>, %77, %cst_39 [2] : vector<1x8x8xf32> to vector<1x8xf32>
    %79 = vector.shape_cast %78 : vector<1x8xf32> to vector<1x8x1xf32>
    %80 = tpu.reciprocal %79 {approx = true} : vector<1x8x1xf32> -> vector<1x8x1xf32>
    %81 = vector.broadcast %80 : vector<1x8x1xf32> to vector<1x8x8xf32>
    %82 = arith.mulf %77, %81 : vector<1x8x8xf32>
    %83 = arith.truncf %82 : vector<1x8x8xf32> to vector<1x8x8xbf16>
    "tpu.trace_start"() <{level = 10 : i32, message = "bqk,bkd->bqd"}> : () -> ()
    %cst_40 = arith.constant dense<0.000000e+00> : vector<1x8x8xf32>
    %84 = tpu.matmul %83, %70, %cst_40 {dimension_numbers = #tpu.dot_dimension_numbers<[2], [1], [1], [2], [0, 0, 0, 1, 1, 2], [0], [0]>} : vector<1x8x8xbf16>, vector<1x8x8xbf16>, vector<1x8x8xf32> -> vector<1x8x8xf32>
    "tpu.trace_stop"() : () -> ()
    %85 = vector.extract_strided_slice %20 {offsets = [0, 0, 24], sizes = [1, 8, 8], strides = [1, 1, 1]} : vector<1x8x32xf32> to vector<1x8x8xf32>
    %86 = arith.truncf %85 : vector<1x8x8xf32> to vector<1x8x8xbf16>
    %87 = vector.extract_strided_slice %22 {offsets = [0, 0, 24], sizes = [1, 8, 8], strides = [1, 1, 1]} : vector<1x8x32xf32> to vector<1x8x8xf32>
    %88 = arith.truncf %87 : vector<1x8x8xf32> to vector<1x8x8xbf16>
    %89 = vector.extract_strided_slice %24 {offsets = [0, 0, 24], sizes = [1, 8, 8], strides = [1, 1, 1]} : vector<1x8x32xf32> to vector<1x8x8xf32>
    %90 = arith.truncf %89 : vector<1x8x8xf32> to vector<1x8x8xbf16>
    "tpu.trace_start"() <{level = 10 : i32, message = "bqd,bkd->bqk"}> : () -> ()
    %cst_41 = arith.constant dense<0.000000e+00> : vector<1x8x8xf32>
    %91 = tpu.matmul %86, %88, %cst_41 {dimension_numbers = #tpu.dot_dimension_numbers<[2], [2], [1], [1], [0, 0, 0, 1, 1, 1], [0], [0]>} : vector<1x8x8xbf16>, vector<1x8x8xbf16>, vector<1x8x8xf32> -> vector<1x8x8xf32>
    "tpu.trace_stop"() : () -> ()
    %92 = arith.addf %91, %2 : vector<1x8x8xf32>
    %cst_42 = arith.constant dense<0xFF800000> : vector<1x8xf32>
    %93 = vector.multi_reduction <maximumf>, %92, %cst_42 [2] : vector<1x8x8xf32> to vector<1x8xf32>
    %94 = vector.shape_cast %93 : vector<1x8xf32> to vector<1x8x1xf32>
    %95 = vector.broadcast %94 : vector<1x8x1xf32> to vector<1x8x8xf32>
    %96 = arith.subf %92, %95 : vector<1x8x8xf32>
    %97 = math.exp %96 : vector<1x8x8xf32>
    %cst_43 = arith.constant dense<0.000000e+00> : vector<1x8xf32>
    %98 = vector.multi_reduction <add>, %97, %cst_43 [2] : vector<1x8x8xf32> to vector<1x8xf32>
    %99 = vector.shape_cast %98 : vector<1x8xf32> to vector<1x8x1xf32>
    %100 = tpu.reciprocal %99 {approx = true} : vector<1x8x1xf32> -> vector<1x8x1xf32>
    %101 = vector.broadcast %100 : vector<1x8x1xf32> to vector<1x8x8xf32>
    %102 = arith.mulf %97, %101 : vector<1x8x8xf32>
    %103 = arith.truncf %102 : vector<1x8x8xf32> to vector<1x8x8xbf16>
    "tpu.trace_start"() <{level = 10 : i32, message = "bqk,bkd->bqd"}> : () -> ()
    %cst_44 = arith.constant dense<0.000000e+00> : vector<1x8x8xf32>
    %104 = tpu.matmul %103, %90, %cst_44 {dimension_numbers = #tpu.dot_dimension_numbers<[2], [1], [1], [2], [0, 0, 0, 1, 1, 2], [0], [0]>} : vector<1x8x8xbf16>, vector<1x8x8xbf16>, vector<1x8x8xf32> -> vector<1x8x8xf32>
    "tpu.trace_stop"() : () -> ()
    %105 = tpu.concatenate %44, %64, %84, %104 in 2 : vector<1x8x8xf32>, vector<1x8x8xf32>, vector<1x8x8xf32>, vector<1x8x8xf32> -> vector<1x8x32xf32>
    %106 = vector.shape_cast %105 : vector<1x8x32xf32> to vector<8x32xf32>
    %107 = arith.truncf %106 : vector<8x32xf32> to vector<8x32xbf16>
    %cst_45 = arith.constant dense<0.000000e+00> : vector<8x32xf32>
    %108 = tpu.matmul %107, %5, %cst_45 {dimension_numbers = #tpu.dot_dimension_numbers<[1], [0], [0], [1], [0, 0, 1, 1], [], []>} : vector<8x32xbf16>, vector<32x32xbf16>, vector<8x32xf32> -> vector<8x32xf32>
    %109 = vector.broadcast %6 : vector<1x32xf32> to vector<8x32xf32>
    %110 = arith.addf %108, %109 : vector<8x32xf32>
    %111 = arith.addf %1, %110 : vector<8x32xf32>
    %cst_46 = arith.constant dense<0.000000e+00> : vector<8xf32>
    %112 = vector.multi_reduction <add>, %111, %cst_46 [1] : vector<8x32xf32> to vector<8xf32>
    %113 = vector.shape_cast %112 : vector<8xf32> to vector<8x1xf32>
    %cst_47 = arith.constant 3.200000e+01 : f32
    %114 = vector.broadcast %cst_47 : f32 to vector<8x1xf32>
    %115 = arith.divf %113, %114 : vector<8x1xf32>
    %116 = vector.broadcast %115 : vector<8x1xf32> to vector<8x32xf32>
    %117 = arith.subf %111, %116 : vector<8x32xf32>
    %118 = arith.mulf %117, %117 : vector<8x32xf32>
    %cst_48 = arith.constant dense<0.000000e+00> : vector<8xf32>
    %119 = vector.multi_reduction <add>, %118, %cst_48 [1] : vector<8x32xf32> to vector<8xf32>
    %120 = vector.shape_cast %119 : vector<8xf32> to vector<8x1xf32>
    %cst_49 = arith.constant 3.200000e+01 : f32
    %121 = vector.broadcast %cst_49 : f32 to vector<8x1xf32>
    %122 = arith.divf %120, %121 : vector<8x1xf32>
    %123 = vector.broadcast %115 : vector<8x1xf32> to vector<8x32xf32>
    %124 = arith.subf %111, %123 : vector<8x32xf32>
    %cst_50 = arith.constant 9.99999974E-6 : f32
    %125 = vector.broadcast %cst_50 : f32 to vector<8x1xf32>
    %126 = arith.addf %122, %125 : vector<8x1xf32>
    %127 = math.rsqrt %126 : vector<8x1xf32>
    %128 = vector.broadcast %127 : vector<8x1xf32> to vector<8x32xf32>
    %129 = arith.mulf %124, %128 : vector<8x32xf32>
    %130 = vector.broadcast %11 : vector<1x32xf32> to vector<8x32xf32>
    %131 = arith.mulf %129, %130 : vector<8x32xf32>
    %132 = vector.broadcast %12 : vector<1x32xf32> to vector<8x32xf32>
    %133 = arith.addf %131, %132 : vector<8x32xf32>
    %134 = arith.truncf %133 : vector<8x32xf32> to vector<8x32xbf16>
    %cst_51 = arith.constant dense<0.000000e+00> : vector<8x64xf32>
    %135 = tpu.matmul %134, %7, %cst_51 {dimension_numbers = #tpu.dot_dimension_numbers<[1], [0], [0], [1], [0, 0, 1, 1], [], []>} : vector<8x32xbf16>, vector<32x64xbf16>, vector<8x64xf32> -> vector<8x64xf32>
    %136 = vector.broadcast %8 : vector<1x64xf32> to vector<8x64xf32>
    %137 = arith.addf %135, %136 : vector<8x64xf32>
    %cst_52 = arith.constant 0.000000e+00 : f32
    %138 = vector.broadcast %cst_52 : f32 to vector<8x64xf32>
    %139 = arith.maximumf %137, %138 : vector<8x64xf32>
    %140 = arith.truncf %139 : vector<8x64xf32> to vector<8x64xbf16>
    %cst_53 = arith.constant dense<0.000000e+00> : vector<8x32xf32>
    %141 = tpu.matmul %140, %9, %cst_53 {dimension_numbers = #tpu.dot_dimension_numbers<[1], [0], [0], [1], [0, 0, 1, 1], [], []>} : vector<8x64xbf16>, vector<64x32xbf16>, vector<8x32xf32> -> vector<8x32xf32>
    %142 = vector.broadcast %10 : vector<1x32xf32> to vector<8x32xf32>
    %143 = arith.addf %141, %142 : vector<8x32xf32>
    %144 = arith.addf %133, %143 : vector<8x32xf32>
    %cst_54 = arith.constant dense<0.000000e+00> : vector<8xf32>
    %145 = vector.multi_reduction <add>, %144, %cst_54 [1] : vector<8x32xf32> to vector<8xf32>
    %146 = vector.shape_cast %145 : vector<8xf32> to vector<8x1xf32>
    %cst_55 = arith.constant 3.200000e+01 : f32
    %147 = vector.broadcast %cst_55 : f32 to vector<8x1xf32>
    %148 = arith.divf %146, %147 : vector<8x1xf32>
    %149 = vector.broadcast %148 : vector<8x1xf32> to vector<8x32xf32>
    %150 = arith.subf %144, %149 : vector<8x32xf32>
    %151 = arith.mulf %150, %150 : vector<8x32xf32>
    %cst_56 = arith.constant dense<0.000000e+00> : vector<8xf32>
    %152 = vector.multi_reduction <add>, %151, %cst_56 [1] : vector<8x32xf32> to vector<8xf32>
    %153 = vector.shape_cast %152 : vector<8xf32> to vector<8x1xf32>
    %cst_57 = arith.constant 3.200000e+01 : f32
    %154 = vector.broadcast %cst_57 : f32 to vector<8x1xf32>
    %155 = arith.divf %153, %154 : vector<8x1xf32>
    %156 = vector.broadcast %148 : vector<8x1xf32> to vector<8x32xf32>
    %157 = arith.subf %144, %156 : vector<8x32xf32>
    %cst_58 = arith.constant 9.99999974E-6 : f32
    %158 = vector.broadcast %cst_58 : f32 to vector<8x1xf32>
    %159 = arith.addf %155, %158 : vector<8x1xf32>
    %160 = math.rsqrt %159 : vector<8x1xf32>
    %161 = vector.broadcast %160 : vector<8x1xf32> to vector<8x32xf32>
    %162 = arith.mulf %157, %161 : vector<8x32xf32>
    %163 = vector.broadcast %13 : vector<1x32xf32> to vector<8x32xf32>
    %164 = arith.mulf %162, %163 : vector<8x32xf32>
    %165 = vector.broadcast %14 : vector<1x32xf32> to vector<8x32xf32>
    %166 = arith.addf %164, %165 : vector<8x32xf32>
    %167 = arith.truncf %166 : vector<8x32xf32> to vector<8x32xbf16>
    %cst_59 = arith.constant dense<0.000000e+00> : vector<8x96xf32>
    %168 = tpu.matmul %167, %3, %cst_59 {dimension_numbers = #tpu.dot_dimension_numbers<[1], [0], [0], [1], [0, 0, 1, 1], [], []>} : vector<8x32xbf16>, vector<32x96xbf16>, vector<8x96xf32> -> vector<8x96xf32>
    %169 = vector.broadcast %4 : vector<1x96xf32> to vector<8x96xf32>
    %170 = arith.addf %168, %169 : vector<8x96xf32>
    %171 = vector.extract_strided_slice %170 {offsets = [0, 0], sizes = [8, 32], strides = [1, 1]} : vector<8x96xf32> to vector<8x32xf32>
    %172 = vector.shape_cast %171 : vector<8x32xf32> to vector<1x8x32xf32>
    %173 = vector.extract_strided_slice %170 {offsets = [0, 32], sizes = [8, 32], strides = [1, 1]} : vector<8x96xf32> to vector<8x32xf32>
    %174 = vector.shape_cast %173 : vector<8x32xf32> to vector<1x8x32xf32>
    %175 = vector.extract_strided_slice %170 {offsets = [0, 64], sizes = [8, 32], strides = [1, 1]} : vector<8x96xf32> to vector<8x32xf32>
    %176 = vector.shape_cast %175 : vector<8x32xf32> to vector<1x8x32xf32>
    %177 = vector.extract_strided_slice %172 {offsets = [0, 0, 0], sizes = [1, 8, 8], strides = [1, 1, 1]} : vector<1x8x32xf32> to vector<1x8x8xf32>
    %178 = arith.truncf %177 : vector<1x8x8xf32> to vector<1x8x8xbf16>
    %179 = vector.extract_strided_slice %174 {offsets = [0, 0, 0], sizes = [1, 8, 8], strides = [1, 1, 1]} : vector<1x8x32xf32> to vector<1x8x8xf32>
    %180 = arith.truncf %179 : vector<1x8x8xf32> to vector<1x8x8xbf16>
    %181 = vector.extract_strided_slice %176 {offsets = [0, 0, 0], sizes = [1, 8, 8], strides = [1, 1, 1]} : vector<1x8x32xf32> to vector<1x8x8xf32>
    %182 = arith.truncf %181 : vector<1x8x8xf32> to vector<1x8x8xbf16>
    "tpu.trace_start"() <{level = 10 : i32, message = "bqd,bkd->bqk"}> : () -> ()
    %cst_60 = arith.constant dense<0.000000e+00> : vector<1x8x8xf32>
    %183 = tpu.matmul %178, %180, %cst_60 {dimension_numbers = #tpu.dot_dimension_numbers<[2], [2], [1], [1], [0, 0, 0, 1, 1, 1], [0], [0]>} : vector<1x8x8xbf16>, vector<1x8x8xbf16>, vector<1x8x8xf32> -> vector<1x8x8xf32>
    "tpu.trace_stop"() : () -> ()
    %184 = arith.addf %183, %2 : vector<1x8x8xf32>
    %cst_61 = arith.constant dense<0xFF800000> : vector<1x8xf32>
    %185 = vector.multi_reduction <maximumf>, %184, %cst_61 [2] : vector<1x8x8xf32> to vector<1x8xf32>
    %186 = vector.shape_cast %185 : vector<1x8xf32> to vector<1x8x1xf32>
    %187 = vector.broadcast %186 : vector<1x8x1xf32> to vector<1x8x8xf32>
    %188 = arith.subf %184, %187 : vector<1x8x8xf32>
    %189 = math.exp %188 : vector<1x8x8xf32>
    %cst_62 = arith.constant dense<0.000000e+00> : vector<1x8xf32>
    %190 = vector.multi_reduction <add>, %189, %cst_62 [2] : vector<1x8x8xf32> to vector<1x8xf32>
    %191 = vector.shape_cast %190 : vector<1x8xf32> to vector<1x8x1xf32>
    %192 = tpu.reciprocal %191 {approx = true} : vector<1x8x1xf32> -> vector<1x8x1xf32>
    %193 = vector.broadcast %192 : vector<1x8x1xf32> to vector<1x8x8xf32>
    %194 = arith.mulf %189, %193 : vector<1x8x8xf32>
    %195 = arith.truncf %194 : vector<1x8x8xf32> to vector<1x8x8xbf16>
    "tpu.trace_start"() <{level = 10 : i32, message = "bqk,bkd->bqd"}> : () -> ()
    %cst_63 = arith.constant dense<0.000000e+00> : vector<1x8x8xf32>
    %196 = tpu.matmul %195, %182, %cst_63 {dimension_numbers = #tpu.dot_dimension_numbers<[2], [1], [1], [2], [0, 0, 0, 1, 1, 2], [0], [0]>} : vector<1x8x8xbf16>, vector<1x8x8xbf16>, vector<1x8x8xf32> -> vector<1x8x8xf32>
    "tpu.trace_stop"() : () -> ()
    %197 = vector.extract_strided_slice %172 {offsets = [0, 0, 8], sizes = [1, 8, 8], strides = [1, 1, 1]} : vector<1x8x32xf32> to vector<1x8x8xf32>
    %198 = arith.truncf %197 : vector<1x8x8xf32> to vector<1x8x8xbf16>
    %199 = vector.extract_strided_slice %174 {offsets = [0, 0, 8], sizes = [1, 8, 8], strides = [1, 1, 1]} : vector<1x8x32xf32> to vector<1x8x8xf32>
    %200 = arith.truncf %199 : vector<1x8x8xf32> to vector<1x8x8xbf16>
    %201 = vector.extract_strided_slice %176 {offsets = [0, 0, 8], sizes = [1, 8, 8], strides = [1, 1, 1]} : vector<1x8x32xf32> to vector<1x8x8xf32>
    %202 = arith.truncf %201 : vector<1x8x8xf32> to vector<1x8x8xbf16>
    "tpu.trace_start"() <{level = 10 : i32, message = "bqd,bkd->bqk"}> : () -> ()
    %cst_64 = arith.constant dense<0.000000e+00> : vector<1x8x8xf32>
    %203 = tpu.matmul %198, %200, %cst_64 {dimension_numbers = #tpu.dot_dimension_numbers<[2], [2], [1], [1], [0, 0, 0, 1, 1, 1], [0], [0]>} : vector<1x8x8xbf16>, vector<1x8x8xbf16>, vector<1x8x8xf32> -> vector<1x8x8xf32>
    "tpu.trace_stop"() : () -> ()
    %204 = arith.addf %203, %2 : vector<1x8x8xf32>
    %cst_65 = arith.constant dense<0xFF800000> : vector<1x8xf32>
    %205 = vector.multi_reduction <maximumf>, %204, %cst_65 [2] : vector<1x8x8xf32> to vector<1x8xf32>
    %206 = vector.shape_cast %205 : vector<1x8xf32> to vector<1x8x1xf32>
    %207 = vector.broadcast %206 : vector<1x8x1xf32> to vector<1x8x8xf32>
    %208 = arith.subf %204, %207 : vector<1x8x8xf32>
    %209 = math.exp %208 : vector<1x8x8xf32>
    %cst_66 = arith.constant dense<0.000000e+00> : vector<1x8xf32>
    %210 = vector.multi_reduction <add>, %209, %cst_66 [2] : vector<1x8x8xf32> to vector<1x8xf32>
    %211 = vector.shape_cast %210 : vector<1x8xf32> to vector<1x8x1xf32>
    %212 = tpu.reciprocal %211 {approx = true} : vector<1x8x1xf32> -> vector<1x8x1xf32>
    %213 = vector.broadcast %212 : vector<1x8x1xf32> to vector<1x8x8xf32>
    %214 = arith.mulf %209, %213 : vector<1x8x8xf32>
    %215 = arith.truncf %214 : vector<1x8x8xf32> to vector<1x8x8xbf16>
    "tpu.trace_start"() <{level = 10 : i32, message = "bqk,bkd->bqd"}> : () -> ()
    %cst_67 = arith.constant dense<0.000000e+00> : vector<1x8x8xf32>
    %216 = tpu.matmul %215, %202, %cst_67 {dimension_numbers = #tpu.dot_dimension_numbers<[2], [1], [1], [2], [0, 0, 0, 1, 1, 2], [0], [0]>} : vector<1x8x8xbf16>, vector<1x8x8xbf16>, vector<1x8x8xf32> -> vector<1x8x8xf32>
    "tpu.trace_stop"() : () -> ()
    %217 = vector.extract_strided_slice %172 {offsets = [0, 0, 16], sizes = [1, 8, 8], strides = [1, 1, 1]} : vector<1x8x32xf32> to vector<1x8x8xf32>
    %218 = arith.truncf %217 : vector<1x8x8xf32> to vector<1x8x8xbf16>
    %219 = vector.extract_strided_slice %174 {offsets = [0, 0, 16], sizes = [1, 8, 8], strides = [1, 1, 1]} : vector<1x8x32xf32> to vector<1x8x8xf32>
    %220 = arith.truncf %219 : vector<1x8x8xf32> to vector<1x8x8xbf16>
    %221 = vector.extract_strided_slice %176 {offsets = [0, 0, 16], sizes = [1, 8, 8], strides = [1, 1, 1]} : vector<1x8x32xf32> to vector<1x8x8xf32>
    %222 = arith.truncf %221 : vector<1x8x8xf32> to vector<1x8x8xbf16>
    "tpu.trace_start"() <{level = 10 : i32, message = "bqd,bkd->bqk"}> : () -> ()
    %cst_68 = arith.constant dense<0.000000e+00> : vector<1x8x8xf32>
    %223 = tpu.matmul %218, %220, %cst_68 {dimension_numbers = #tpu.dot_dimension_numbers<[2], [2], [1], [1], [0, 0, 0, 1, 1, 1], [0], [0]>} : vector<1x8x8xbf16>, vector<1x8x8xbf16>, vector<1x8x8xf32> -> vector<1x8x8xf32>
    "tpu.trace_stop"() : () -> ()
    %224 = arith.addf %223, %2 : vector<1x8x8xf32>
    %cst_69 = arith.constant dense<0xFF800000> : vector<1x8xf32>
    %225 = vector.multi_reduction <maximumf>, %224, %cst_69 [2] : vector<1x8x8xf32> to vector<1x8xf32>
    %226 = vector.shape_cast %225 : vector<1x8xf32> to vector<1x8x1xf32>
    %227 = vector.broadcast %226 : vector<1x8x1xf32> to vector<1x8x8xf32>
    %228 = arith.subf %224, %227 : vector<1x8x8xf32>
    %229 = math.exp %228 : vector<1x8x8xf32>
    %cst_70 = arith.constant dense<0.000000e+00> : vector<1x8xf32>
    %230 = vector.multi_reduction <add>, %229, %cst_70 [2] : vector<1x8x8xf32> to vector<1x8xf32>
    %231 = vector.shape_cast %230 : vector<1x8xf32> to vector<1x8x1xf32>
    %232 = tpu.reciprocal %231 {approx = true} : vector<1x8x1xf32> -> vector<1x8x1xf32>
    %233 = vector.broadcast %232 : vector<1x8x1xf32> to vector<1x8x8xf32>
    %234 = arith.mulf %229, %233 : vector<1x8x8xf32>
    %235 = arith.truncf %234 : vector<1x8x8xf32> to vector<1x8x8xbf16>
    "tpu.trace_start"() <{level = 10 : i32, message = "bqk,bkd->bqd"}> : () -> ()
    %cst_71 = arith.constant dense<0.000000e+00> : vector<1x8x8xf32>
    %236 = tpu.matmul %235, %222, %cst_71 {dimension_numbers = #tpu.dot_dimension_numbers<[2], [1], [1], [2], [0, 0, 0, 1, 1, 2], [0], [0]>} : vector<1x8x8xbf16>, vector<1x8x8xbf16>, vector<1x8x8xf32> -> vector<1x8x8xf32>
    "tpu.trace_stop"() : () -> ()
    %237 = vector.extract_strided_slice %172 {offsets = [0, 0, 24], sizes = [1, 8, 8], strides = [1, 1, 1]} : vector<1x8x32xf32> to vector<1x8x8xf32>
    %238 = arith.truncf %237 : vector<1x8x8xf32> to vector<1x8x8xbf16>
    %239 = vector.extract_strided_slice %174 {offsets = [0, 0, 24], sizes = [1, 8, 8], strides = [1, 1, 1]} : vector<1x8x32xf32> to vector<1x8x8xf32>
    %240 = arith.truncf %239 : vector<1x8x8xf32> to vector<1x8x8xbf16>
    %241 = vector.extract_strided_slice %176 {offsets = [0, 0, 24], sizes = [1, 8, 8], strides = [1, 1, 1]} : vector<1x8x32xf32> to vector<1x8x8xf32>
    %242 = arith.truncf %241 : vector<1x8x8xf32> to vector<1x8x8xbf16>
    "tpu.trace_start"() <{level = 10 : i32, message = "bqd,bkd->bqk"}> : () -> ()
    %cst_72 = arith.constant dense<0.000000e+00> : vector<1x8x8xf32>
    %243 = tpu.matmul %238, %240, %cst_72 {dimension_numbers = #tpu.dot_dimension_numbers<[2], [2], [1], [1], [0, 0, 0, 1, 1, 1], [0], [0]>} : vector<1x8x8xbf16>, vector<1x8x8xbf16>, vector<1x8x8xf32> -> vector<1x8x8xf32>
    "tpu.trace_stop"() : () -> ()
    %244 = arith.addf %243, %2 : vector<1x8x8xf32>
    %cst_73 = arith.constant dense<0xFF800000> : vector<1x8xf32>
    %245 = vector.multi_reduction <maximumf>, %244, %cst_73 [2] : vector<1x8x8xf32> to vector<1x8xf32>
    %246 = vector.shape_cast %245 : vector<1x8xf32> to vector<1x8x1xf32>
    %247 = vector.broadcast %246 : vector<1x8x1xf32> to vector<1x8x8xf32>
    %248 = arith.subf %244, %247 : vector<1x8x8xf32>
    %249 = math.exp %248 : vector<1x8x8xf32>
    %cst_74 = arith.constant dense<0.000000e+00> : vector<1x8xf32>
    %250 = vector.multi_reduction <add>, %249, %cst_74 [2] : vector<1x8x8xf32> to vector<1x8xf32>
    %251 = vector.shape_cast %250 : vector<1x8xf32> to vector<1x8x1xf32>
    %252 = tpu.reciprocal %251 {approx = true} : vector<1x8x1xf32> -> vector<1x8x1xf32>
    %253 = vector.broadcast %252 : vector<1x8x1xf32> to vector<1x8x8xf32>
    %254 = arith.mulf %249, %253 : vector<1x8x8xf32>
    %255 = arith.truncf %254 : vector<1x8x8xf32> to vector<1x8x8xbf16>
    "tpu.trace_start"() <{level = 10 : i32, message = "bqk,bkd->bqd"}> : () -> ()
    %cst_75 = arith.constant dense<0.000000e+00> : vector<1x8x8xf32>
    %256 = tpu.matmul %255, %242, %cst_75 {dimension_numbers = #tpu.dot_dimension_numbers<[2], [1], [1], [2], [0, 0, 0, 1, 1, 2], [0], [0]>} : vector<1x8x8xbf16>, vector<1x8x8xbf16>, vector<1x8x8xf32> -> vector<1x8x8xf32>
    "tpu.trace_stop"() : () -> ()
    %257 = tpu.concatenate %196, %216, %236, %256 in 2 : vector<1x8x8xf32>, vector<1x8x8xf32>, vector<1x8x8xf32>, vector<1x8x8xf32> -> vector<1x8x32xf32>
    %258 = vector.shape_cast %257 : vector<1x8x32xf32> to vector<8x32xf32>
    %259 = arith.truncf %258 : vector<8x32xf32> to vector<8x32xbf16>
    %cst_76 = arith.constant dense<0.000000e+00> : vector<8x32xf32>
    %260 = tpu.matmul %259, %5, %cst_76 {dimension_numbers = #tpu.dot_dimension_numbers<[1], [0], [0], [1], [0, 0, 1, 1], [], []>} : vector<8x32xbf16>, vector<32x32xbf16>, vector<8x32xf32> -> vector<8x32xf32>
    %261 = vector.broadcast %6 : vector<1x32xf32> to vector<8x32xf32>
    %262 = arith.addf %260, %261 : vector<8x32xf32>
    %263 = arith.addf %166, %262 : vector<8x32xf32>
    %cst_77 = arith.constant dense<0.000000e+00> : vector<8xf32>
    %264 = vector.multi_reduction <add>, %263, %cst_77 [1] : vector<8x32xf32> to vector<8xf32>
    %265 = vector.shape_cast %264 : vector<8xf32> to vector<8x1xf32>
    %cst_78 = arith.constant 3.200000e+01 : f32
    %266 = vector.broadcast %cst_78 : f32 to vector<8x1xf32>
    %267 = arith.divf %265, %266 : vector<8x1xf32>
    %268 = vector.broadcast %267 : vector<8x1xf32> to vector<8x32xf32>
    %269 = arith.subf %263, %268 : vector<8x32xf32>
    %270 = arith.mulf %269, %269 : vector<8x32xf32>
    %cst_79 = arith.constant dense<0.000000e+00> : vector<8xf32>
    %271 = vector.multi_reduction <add>, %270, %cst_79 [1] : vector<8x32xf32> to vector<8xf32>
    %272 = vector.shape_cast %271 : vector<8xf32> to vector<8x1xf32>
    %cst_80 = arith.constant 3.200000e+01 : f32
    %273 = vector.broadcast %cst_80 : f32 to vector<8x1xf32>
    %274 = arith.divf %272, %273 : vector<8x1xf32>
    %275 = vector.broadcast %267 : vector<8x1xf32> to vector<8x32xf32>
    %276 = arith.subf %263, %275 : vector<8x32xf32>
    %cst_81 = arith.constant 9.99999974E-6 : f32
    %277 = vector.broadcast %cst_81 : f32 to vector<8x1xf32>
    %278 = arith.addf %274, %277 : vector<8x1xf32>
    %279 = math.rsqrt %278 : vector<8x1xf32>
    %280 = vector.broadcast %279 : vector<8x1xf32> to vector<8x32xf32>
    %281 = arith.mulf %276, %280 : vector<8x32xf32>
    %282 = vector.broadcast %11 : vector<1x32xf32> to vector<8x32xf32>
    %283 = arith.mulf %281, %282 : vector<8x32xf32>
    %284 = vector.broadcast %12 : vector<1x32xf32> to vector<8x32xf32>
    %285 = arith.addf %283, %284 : vector<8x32xf32>
    %286 = arith.truncf %285 : vector<8x32xf32> to vector<8x32xbf16>
    %cst_82 = arith.constant dense<0.000000e+00> : vector<8x64xf32>
    %287 = tpu.matmul %286, %7, %cst_82 {dimension_numbers = #tpu.dot_dimension_numbers<[1], [0], [0], [1], [0, 0, 1, 1], [], []>} : vector<8x32xbf16>, vector<32x64xbf16>, vector<8x64xf32> -> vector<8x64xf32>
    %288 = vector.broadcast %8 : vector<1x64xf32> to vector<8x64xf32>
    %289 = arith.addf %287, %288 : vector<8x64xf32>
    %cst_83 = arith.constant 0.000000e+00 : f32
    %290 = vector.broadcast %cst_83 : f32 to vector<8x64xf32>
    %291 = arith.maximumf %289, %290 : vector<8x64xf32>
    %292 = arith.truncf %291 : vector<8x64xf32> to vector<8x64xbf16>
    %cst_84 = arith.constant dense<0.000000e+00> : vector<8x32xf32>
    %293 = tpu.matmul %292, %9, %cst_84 {dimension_numbers = #tpu.dot_dimension_numbers<[1], [0], [0], [1], [0, 0, 1, 1], [], []>} : vector<8x64xbf16>, vector<64x32xbf16>, vector<8x32xf32> -> vector<8x32xf32>
    %294 = vector.broadcast %10 : vector<1x32xf32> to vector<8x32xf32>
    %295 = arith.addf %293, %294 : vector<8x32xf32>
    %296 = arith.addf %285, %295 : vector<8x32xf32>
    %cst_85 = arith.constant dense<0.000000e+00> : vector<8xf32>
    %297 = vector.multi_reduction <add>, %296, %cst_85 [1] : vector<8x32xf32> to vector<8xf32>
    %298 = vector.shape_cast %297 : vector<8xf32> to vector<8x1xf32>
    %cst_86 = arith.constant 3.200000e+01 : f32
    %299 = vector.broadcast %cst_86 : f32 to vector<8x1xf32>
    %300 = arith.divf %298, %299 : vector<8x1xf32>
    %301 = vector.broadcast %300 : vector<8x1xf32> to vector<8x32xf32>
    %302 = arith.subf %296, %301 : vector<8x32xf32>
    %303 = arith.mulf %302, %302 : vector<8x32xf32>
    %cst_87 = arith.constant dense<0.000000e+00> : vector<8xf32>
    %304 = vector.multi_reduction <add>, %303, %cst_87 [1] : vector<8x32xf32> to vector<8xf32>
    %305 = vector.shape_cast %304 : vector<8xf32> to vector<8x1xf32>
    %cst_88 = arith.constant 3.200000e+01 : f32
    %306 = vector.broadcast %cst_88 : f32 to vector<8x1xf32>
    %307 = arith.divf %305, %306 : vector<8x1xf32>
    %308 = vector.broadcast %300 : vector<8x1xf32> to vector<8x32xf32>
    %309 = arith.subf %296, %308 : vector<8x32xf32>
    %cst_89 = arith.constant 9.99999974E-6 : f32
    %310 = vector.broadcast %cst_89 : f32 to vector<8x1xf32>
    %311 = arith.addf %307, %310 : vector<8x1xf32>
    %312 = math.rsqrt %311 : vector<8x1xf32>
    %313 = vector.broadcast %312 : vector<8x1xf32> to vector<8x32xf32>
    %314 = arith.mulf %309, %313 : vector<8x32xf32>
    %315 = vector.broadcast %13 : vector<1x32xf32> to vector<8x32xf32>
    %316 = arith.mulf %314, %315 : vector<8x32xf32>
    %317 = vector.broadcast %14 : vector<1x32xf32> to vector<8x32xf32>
    %318 = arith.addf %316, %317 : vector<8x32xf32>
    %319 = vector.shape_cast %318 : vector<8x32xf32> to vector<1x8x32xf32>
    %c0_90 = arith.constant 0 : index
    %c0_91 = arith.constant 0 : index
    %c0_92 = arith.constant 0 : index
    %320 = vector.load %arg15[%c0_90, %c0_91, %c0_92] : memref<1x8x32xf32, #tpu.memory_space<vmem>>, vector<1x8x32xf32>
    tpu.vector_store %arg15[%c0_90, %c0_91, %c0_92], %319 {strides = array<i32>} : memref<1x8x32xf32, #tpu.memory_space<vmem>>, vector<1x8x32xf32>,
    return
  }
  func.func @transform_0(%arg0: i32) -> (i32, i32, i32) {
    %c0_i32 = arith.constant 0 : i32
    %c0_i32_0 = arith.constant 0 : i32
    %c0_i32_1 = arith.constant 0 : i32
    return %arg0, %c0_i32, %c0_i32_0 : i32, i32, i32
  }
  func.func @transform_1(%arg0: i32) -> (i32, i32, i32) {
    %c0_i32 = arith.constant 0 : i32
    %c0_i32_0 = arith.constant 0 : i32
    %c0_i32_1 = arith.constant 0 : i32
    return %arg0, %c0_i32, %c0_i32_0 : i32, i32, i32
  }
  func.func @transform_2(%arg0: i32) -> (i32, i32) {
    %c0_i32 = arith.constant 0 : i32
    %c0_i32_0 = arith.constant 0 : i32
    %c0_i32_1 = arith.constant 0 : i32
    return %c0_i32, %c0_i32_0 : i32, i32
  }
  func.func @transform_3(%arg0: i32) -> (i32, i32) {
    %c0_i32 = arith.constant 0 : i32
    %c0_i32_0 = arith.constant 0 : i32
    %c0_i32_1 = arith.constant 0 : i32
    return %c0_i32, %c0_i32_0 : i32, i32
  }
  func.func @transform_4(%arg0: i32) -> (i32, i32) {
    %c0_i32 = arith.constant 0 : i32
    %c0_i32_0 = arith.constant 0 : i32
    %c0_i32_1 = arith.constant 0 : i32
    return %c0_i32, %c0_i32_0 : i32, i32
  }
  func.func @transform_5(%arg0: i32) -> (i32, i32) {
    %c0_i32 = arith.constant 0 : i32
    %c0_i32_0 = arith.constant 0 : i32
    %c0_i32_1 = arith.constant 0 : i32
    return %c0_i32, %c0_i32_0 : i32, i32
  }
  func.func @transform_6(%arg0: i32) -> (i32, i32) {
    %c0_i32 = arith.constant 0 : i32
    %c0_i32_0 = arith.constant 0 : i32
    %c0_i32_1 = arith.constant 0 : i32
    return %c0_i32, %c0_i32_0 : i32, i32
  }
  func.func @transform_7(%arg0: i32) -> (i32, i32) {
    %c0_i32 = arith.constant 0 : i32
    %c0_i32_0 = arith.constant 0 : i32
    %c0_i32_1 = arith.constant 0 : i32
    return %c0_i32, %c0_i32_0 : i32, i32
  }
  func.func @transform_8(%arg0: i32) -> (i32, i32) {
    %c0_i32 = arith.constant 0 : i32
    %c0_i32_0 = arith.constant 0 : i32
    %c0_i32_1 = arith.constant 0 : i32
    return %c0_i32, %c0_i32_0 : i32, i32
  }
  func.func @transform_9(%arg0: i32) -> (i32, i32) {
    %c0_i32 = arith.constant 0 : i32
    %c0_i32_0 = arith.constant 0 : i32
    %c0_i32_1 = arith.constant 0 : i32
    return %c0_i32, %c0_i32_0 : i32, i32
  }
  func.func @transform_10(%arg0: i32) -> (i32, i32) {
    %c0_i32 = arith.constant 0 : i32
    %c0_i32_0 = arith.constant 0 : i32
    %c0_i32_1 = arith.constant 0 : i32
    return %c0_i32, %c0_i32_0 : i32, i32
  }
  func.func @transform_11(%arg0: i32) -> (i32, i32) {
    %c0_i32 = arith.constant 0 : i32
    %c0_i32_0 = arith.constant 0 : i32
    %c0_i32_1 = arith.constant 0 : i32
    return %c0_i32, %c0_i32_0 : i32, i32
  }
  func.func @transform_12(%arg0: i32) -> (i32, i32) {
    %c0_i32 = arith.constant 0 : i32
    %c0_i32_0 = arith.constant 0 : i32
    %c0_i32_1 = arith.constant 0 : i32
    return %c0_i32, %c0_i32_0 : i32, i32
  }
  func.func @transform_13(%arg0: i32) -> (i32, i32) {
    %c0_i32 = arith.constant 0 : i32
    %c0_i32_0 = arith.constant 0 : i32
    %c0_i32_1 = arith.constant 0 : i32
    return %c0_i32, %c0_i32_0 : i32, i32
  }
  func.func @transform_14(%arg0: i32) -> (i32, i32, i32) {
    %c0_i32 = arith.constant 0 : i32
    %c0_i32_0 = arith.constant 0 : i32
    %c0_i32_1 = arith.constant 0 : i32
    return %arg0, %c0_i32, %c0_i32_0 : i32, i32, i32
  }
}

</mosaic_0001>

<llo_original>
// kernel: tpu_custom_call.1
$region0: #{tpu_custom_call.1}
  #allocation0 [shape = 'u32[]', space=smem, size = 0x4, offset = 0x4, fixed_abs, tag = 'smem constant byte address 0x4 - core index']
  #allocation1 [shape = 'u32[144,128]{1,0:T(1,128)}', space=vmem, size = 0x12000, scoped, tag = 'internal scratch']
  %s0 = inlined_call_operand.vmem [shape: f32[2,8,32], index: 0, kind: input, shape index: {}]
  %s1 = inlined_call_operand.vmem [shape: f32[2,8,8], index: 1, kind: input, shape index: {}]
  %s2 = inlined_call_operand.vmem [shape: bf16[32,96], index: 2, kind: input, shape index: {}]
  %s3 = inlined_call_operand.vmem [shape: f32[1,96], index: 3, kind: input, shape index: {}]
  %s4 = inlined_call_operand.hbm [shape: bf16[32,32], index: 4, kind: input, shape index: {}]
  %s5 = inlined_call_operand.vmem [shape: f32[1,32], index: 5, kind: input, shape index: {}]
  %s6 = inlined_call_operand.hbm [shape: f32[1,32], index: 6, kind: input, shape index: {}]
  %s7 = inlined_call_operand.hbm [shape: f32[1,32], index: 7, kind: input, shape index: {}]
  %s8 = inlined_call_operand.hbm [shape: f32[1,32], index: 8, kind: input, shape index: {}]
  %s9 = inlined_call_operand.hbm [shape: f32[1,32], index: 9, kind: input, shape index: {}]
  %s10 = inlined_call_operand.vmem [shape: bf16[32,64], index: 10, kind: input, shape index: {}]
  %s11 = inlined_call_operand.vmem [shape: f32[1,64], index: 11, kind: input, shape index: {}]
  %s12 = inlined_call_operand.vmem [shape: bf16[64,32], index: 12, kind: input, shape index: {}]
  %s13 = inlined_call_operand.vmem [shape: f32[1,32], index: 13, kind: input, shape index: {}]
  %s14 = inlined_call_operand.hbm [shape: f32[2,8,32], index: 14, kind: output, shape index: {}]
  %s15 = sld [smem:[#allocation0]]
  $region109: #{tpu_custom_call.1} parent=0
    _
  %s17 = ssub.s32 1, %s15
  %s18 = scalar_select 0, %s17, %s15
  $region1: #{tpu_custom_call.1} parent=0
    #allocation2 [shape = 'u8[8192]{0}', space=vmem, size = 0x2000, scoped, tag = 'input window, operand 4, single buffered']
    #allocation3 [shape = 's32[2]{0}', space=sflag, size = 0x8, scoped, tag = 'scoped memory for tpu_custom_call.1']
    #allocation4 [shape = 's32[2]{0}', space=sflag, size = 0x8, scoped, tag = 'scoped memory for tpu_custom_call.1']
    #allocation5 [shape = 'u8[512]{0}', space=vmem, size = 0x400, scoped, tag = 'input window, operand 6, single buffered']
    #allocation6 [shape = 's32[1]{0}', space=sflag, size = 0x4, scoped, tag = 'scoped memory for tpu_custom_call.1']
    #allocation7 [shape = 'u8[512]{0}', space=vmem, size = 0x400, scoped, tag = 'input window, operand 7, single buffered']
    #allocation8 [shape = 'u8[512]{0}', space=vmem, size = 0x400, scoped, tag = 'input window, operand 8, single buffered']
    #allocation9 [shape = 's32[1]{0}', space=sflag, size = 0x4, scoped, tag = 'scoped memory for tpu_custom_call.1']
    #allocation10 [shape = 'u8[512]{0}', space=vmem, size = 0x400, scoped, tag = 'input window, operand 9, single buffered']
    #allocation11 [shape = 'u8[8192]{0}', space=vmem, size = 0x2000, scoped, tag = 'output window, operand 0']
    %19 = vsyncpa [#allocation3], 0
    %20 = vsyncpa [#allocation6], 0
    %21 = vsyncpa [#allocation9], 0
    %22 = vsyncpa [#allocation4], 0
    %s23 = scalar_lea.sflag [#allocation4], 1
    %24 = vsyncpa %s23, 0
    loop: start=0, step=1, limit=4
    $region2: #{tpu_custom_call.1} parent=1 // loop_pre_header
      _
    $region3: #{tpu_custom_call.1} parent=1 // loop_header
      %s26 = sphi 0, %s30
      %p27 = scmp.ge.s32.totalorder %s26, 4
      %s36 = sphi 0, %s38
      %s39 = sphi 0, %s36
      %s40 = sphi 0, %s39
      %s56 = sphi 0, %s40
      %s62 = sphi 0, %s64
      %s65 = sphi 0, %s62
      %s66 = sphi 0, %s65
      %s82 = sphi 0, %s66
      %s86 = sphi 0, %s86
      %s88 = sphi 0, %s86
      %s89 = sphi 0, %s88
      %s103 = sphi 0, %s89
      %s107 = sphi 0, %s107
      %s109 = sphi 0, %s107
      %s110 = sphi 0, %s109
      %s124 = sphi 0, %s110
      %s128 = sphi 0, %s128
      %s130 = sphi 0, %s128
      %s131 = sphi 0, %s130
      %s145 = sphi 0, %s131
      %s149 = sphi 0, %s149
      %s151 = sphi 0, %s149
      %s152 = sphi 0, %s151
      %s166 = sphi 0, %s152
      %s170 = sphi 0, %s170
      %s172 = sphi 0, %s170
      %s173 = sphi 0, %s172
      %s187 = sphi 0, %s173
      %s191 = sphi 0, %s191
      %s193 = sphi 0, %s191
      %s194 = sphi 0, %s193
      %s208 = sphi 0, %s194
      %s212 = sphi 0, %s212
      %s214 = sphi 0, %s212
      %s215 = sphi 0, %s214
      %s229 = sphi 0, %s215
      %s233 = sphi 0, %s233
      %s235 = sphi 0, %s233
      %s236 = sphi 0, %s235
      %s250 = sphi 0, %s236
      %s254 = sphi 0, %s254
      %s256 = sphi 0, %s254
      %s257 = sphi 0, %s256
      %s271 = sphi 0, %s257
      %s275 = sphi 0, %s275
      %s277 = sphi 0, %s275
      %s278 = sphi 0, %s277
      %s292 = sphi 0, %s278
      %s296 = sphi 0, %s296
      %s298 = sphi 0, %s296
      %s299 = sphi 0, %s298
      %s313 = sphi 0, %s299
      %s317 = sphi 0, %s317
      %s319 = sphi 0, %s317
      %s320 = sphi 0, %s319
      %s334 = sphi 0, %s320
      %s340 = sphi 0, %s342
      %s343 = sphi 0, %s340
      %s344 = sphi 0, %s343
      %s360 = sphi 0, %s344
    $region4: #{tpu_custom_call.1} parent=1 // loop_header_branch
      %29 = sbr.rel (%p27) target = $region8
    $region5: #{tpu_custom_call.1} parent=1 // loop_body
      %s31 = ssub.s32 %s26, 1
      %s32 = ssub.s32 %s26, 2
      %s33 = sadd.s32 %s26, 1
      %s34 = ssub.s32 %s26, %s33
      %p35 = scmp.eq.s32.totalorder %s34, 0
      %s37 = sadd.s32 %s36, 1
      %s38 = scalar_select %p35, %s36, %s37
      %p41 = pneg %p35
      %p42 = scmp.eq.s32.totalorder %s26, 1
      %p43 = por %p41, %p42
      %p44 = scmp.ne.s32.totalorder %s36, %s39
      %p45 = scmp.eq.s32.totalorder %s26, 0
      %p46 = por %p44, %p45
      %p47 = scmp.ne.s32.totalorder %s36, %s39
      %p48 = scmp.eq.s32.totalorder %s31, 1
      %p49 = por %p47, %p48
      %p50 = scmp.ne.s32.totalorder %s39, %s40
      %p51 = scmp.eq.s32.totalorder %s31, 0
      %p52 = por %p50, %p51
      %p53 = scmp.ne.s32.totalorder %s39, %s40
      %p54 = scmp.eq.s32.totalorder %s32, 1
      %p55 = por %p53, %p54
      %p57 = scmp.ne.s32.totalorder %s40, %s56
      %p58 = scmp.eq.s32.totalorder %s32, 0
      %p59 = por %p57, %p58
      %s60 = ssub.s32 %s26, %s33
      %p61 = scmp.eq.s32.totalorder %s60, 0
      %s63 = sadd.s32 %s62, 1
      %s64 = scalar_select %p61, %s62, %s63
      %p67 = pneg %p61
      %p68 = scmp.eq.s32.totalorder %s26, 1
      %p69 = por %p67, %p68
      %p70 = scmp.ne.s32.totalorder %s62, %s65
      %p71 = scmp.eq.s32.totalorder %s26, 0
      %p72 = por %p70, %p71
      %p73 = scmp.ne.s32.totalorder %s62, %s65
      %p74 = scmp.eq.s32.totalorder %s31, 1
      %p75 = por %p73, %p74
      %p76 = scmp.ne.s32.totalorder %s65, %s66
      %p77 = scmp.eq.s32.totalorder %s31, 0
      %p78 = por %p76, %p77
      %p79 = scmp.ne.s32.totalorder %s65, %s66
      %p80 = scmp.eq.s32.totalorder %s32, 1
      %p81 = por %p79, %p80
      %p83 = scmp.ne.s32.totalorder %s66, %s82
      %p84 = scmp.eq.s32.totalorder %s32, 0
      %p85 = por %p83, %p84
      %s87 = sadd.s32 %s86, 1
      %p90 = scmp.eq.s32.totalorder %s26, 1
      %p91 = scmp.ne.s32.totalorder %s86, %s88
      %p92 = scmp.eq.s32.totalorder %s26, 0
      %p93 = por %p91, %p92
      %p94 = scmp.ne.s32.totalorder %s86, %s88
      %p95 = scmp.eq.s32.totalorder %s31, 1
      %p96 = por %p94, %p95
      %p97 = scmp.ne.s32.totalorder %s88, %s89
      %p98 = scmp.eq.s32.totalorder %s31, 0
      %p99 = por %p97, %p98
      %p100 = scmp.ne.s32.totalorder %s88, %s89
      %p101 = scmp.eq.s32.totalorder %s32, 1
      %p102 = por %p100, %p101
      %p104 = scmp.ne.s32.totalorder %s89, %s103
      %p105 = scmp.eq.s32.totalorder %s32, 0
      %p106 = por %p104, %p105
      %s108 = sadd.s32 %s107, 1
      %p111 = scmp.eq.s32.totalorder %s26, 1
      %p112 = scmp.ne.s32.totalorder %s107, %s109
      %p113 = scmp.eq.s32.totalorder %s26, 0
      %p114 = por %p112, %p113
      %p115 = scmp.ne.s32.totalorder %s107, %s109
      %p116 = scmp.eq.s32.totalorder %s31, 1
      %p117 = por %p115, %p116
      %p118 = scmp.ne.s32.totalorder %s109, %s110
      %p119 = scmp.eq.s32.totalorder %s31, 0
      %p120 = por %p118, %p119
      %p121 = scmp.ne.s32.totalorder %s109, %s110
      %p122 = scmp.eq.s32.totalorder %s32, 1
      %p123 = por %p121, %p122
      %p125 = scmp.ne.s32.totalorder %s110, %s124
      %p126 = scmp.eq.s32.totalorder %s32, 0
      %p127 = por %p125, %p126
      %s129 = sadd.s32 %s128, 1
      %p132 = scmp.eq.s32.totalorder %s26, 1
      %p133 = scmp.ne.s32.totalorder %s128, %s130
      %p134 = scmp.eq.s32.totalorder %s26, 0
      %p135 = por %p133, %p134
      %p136 = scmp.ne.s32.totalorder %s128, %s130
      %p137 = scmp.eq.s32.totalorder %s31, 1
      %p138 = por %p136, %p137
      %p139 = scmp.ne.s32.totalorder %s130, %s131
      %p140 = scmp.eq.s32.totalorder %s31, 0
      %p141 = por %p139, %p140
      %p142 = scmp.ne.s32.totalorder %s130, %s131
      %p143 = scmp.eq.s32.totalorder %s32, 1
      %p144 = por %p142, %p143
      %p146 = scmp.ne.s32.totalorder %s131, %s145
      %p147 = scmp.eq.s32.totalorder %s32, 0
      %p148 = por %p146, %p147
      %s150 = sadd.s32 %s149, 1
      %p153 = scmp.eq.s32.totalorder %s26, 1
      %p154 = scmp.ne.s32.totalorder %s149, %s151
      %p155 = scmp.eq.s32.totalorder %s26, 0
      %p156 = por %p154, %p155
      %p157 = scmp.ne.s32.totalorder %s149, %s151
      %p158 = scmp.eq.s32.totalorder %s31, 1
      %p159 = por %p157, %p158
      %p160 = scmp.ne.s32.totalorder %s151, %s152
      %p161 = scmp.eq.s32.totalorder %s31, 0
      %p162 = por %p160, %p161
      %p163 = scmp.ne.s32.totalorder %s151, %s152
      %p164 = scmp.eq.s32.totalorder %s32, 1
      %p165 = por %p163, %p164
      %p167 = scmp.ne.s32.totalorder %s152, %s166
      %p168 = scmp.eq.s32.totalorder %s32, 0
      %p169 = por %p167, %p168
      %s171 = sadd.s32 %s170, 1
      %p174 = scmp.eq.s32.totalorder %s26, 1
      %p175 = scmp.ne.s32.totalorder %s170, %s172
      %p176 = scmp.eq.s32.totalorder %s26, 0
      %p177 = por %p175, %p176
      %p178 = scmp.ne.s32.totalorder %s170, %s172
      %p179 = scmp.eq.s32.totalorder %s31, 1
      %p180 = por %p178, %p179
      %p181 = scmp.ne.s32.totalorder %s172, %s173
      %p182 = scmp.eq.s32.totalorder %s31, 0
      %p183 = por %p181, %p182
      %p184 = scmp.ne.s32.totalorder %s172, %s173
      %p185 = scmp.eq.s32.totalorder %s32, 1
      %p186 = por %p184, %p185
      %p188 = scmp.ne.s32.totalorder %s173, %s187
      %p189 = scmp.eq.s32.totalorder %s32, 0
      %p190 = por %p188, %p189
      %s192 = sadd.s32 %s191, 1
      %p195 = scmp.eq.s32.totalorder %s26, 1
      %p196 = scmp.ne.s32.totalorder %s191, %s193
      %p197 = scmp.eq.s32.totalorder %s26, 0
      %p198 = por %p196, %p197
      %p199 = scmp.ne.s32.totalorder %s191, %s193
      %p200 = scmp.eq.s32.totalorder %s31, 1
      %p201 = por %p199, %p200
      %p202 = scmp.ne.s32.totalorder %s193, %s194
      %p203 = scmp.eq.s32.totalorder %s31, 0
      %p204 = por %p202, %p203
      %p205 = scmp.ne.s32.totalorder %s193, %s194
      %p206 = scmp.eq.s32.totalorder %s32, 1
      %p207 = por %p205, %p206
      %p209 = scmp.ne.s32.totalorder %s194, %s208
      %p210 = scmp.eq.s32.totalorder %s32, 0
      %p211 = por %p209, %p210
      %s213 = sadd.s32 %s212, 1
      %p216 = scmp.eq.s32.totalorder %s26, 1
      %p217 = scmp.ne.s32.totalorder %s212, %s214
      %p218 = scmp.eq.s32.totalorder %s26, 0
      %p219 = por %p217, %p218
      %p220 = scmp.ne.s32.totalorder %s212, %s214
      %p221 = scmp.eq.s32.totalorder %s31, 1
      %p222 = por %p220, %p221
      %p223 = scmp.ne.s32.totalorder %s214, %s215
      %p224 = scmp.eq.s32.totalorder %s31, 0
      %p225 = por %p223, %p224
      %p226 = scmp.ne.s32.totalorder %s214, %s215
      %p227 = scmp.eq.s32.totalorder %s32, 1
      %p228 = por %p226, %p227
      %p230 = scmp.ne.s32.totalorder %s215, %s229
      %p231 = scmp.eq.s32.totalorder %s32, 0
      %p232 = por %p230, %p231
      %s234 = sadd.s32 %s233, 1
      %p237 = scmp.eq.s32.totalorder %s26, 1
      %p238 = scmp.ne.s32.totalorder %s233, %s235
      %p239 = scmp.eq.s32.totalorder %s26, 0
      %p240 = por %p238, %p239
      %p241 = scmp.ne.s32.totalorder %s233, %s235
      %p242 = scmp.eq.s32.totalorder %s31, 1
      %p243 = por %p241, %p242
      %p244 = scmp.ne.s32.totalorder %s235, %s236
      %p245 = scmp.eq.s32.totalorder %s31, 0
      %p246 = por %p244, %p245
      %p247 = scmp.ne.s32.totalorder %s235, %s236
      %p248 = scmp.eq.s32.totalorder %s32, 1
      %p249 = por %p247, %p248
      %p251 = scmp.ne.s32.totalorder %s236, %s250
      %p252 = scmp.eq.s32.totalorder %s32, 0
      %p253 = por %p251, %p252
      %s255 = sadd.s32 %s254, 1
      %p258 = scmp.eq.s32.totalorder %s26, 1
      %p259 = scmp.ne.s32.totalorder %s254, %s256
      %p260 = scmp.eq.s32.totalorder %s26, 0
      %p261 = por %p259, %p260
      %p262 = scmp.ne.s32.totalorder %s254, %s256
      %p263 = scmp.eq.s32.totalorder %s31, 1
      %p264 = por %p262, %p263
      %p265 = scmp.ne.s32.totalorder %s256, %s257
      %p266 = scmp.eq.s32.totalorder %s31, 0
      %p267 = por %p265, %p266
      %p268 = scmp.ne.s32.totalorder %s256, %s257
      %p269 = scmp.eq.s32.totalorder %s32, 1
      %p270 = por %p268, %p269
      %p272 = scmp.ne.s32.totalorder %s257, %s271
      %p273 = scmp.eq.s32.totalorder %s32, 0
      %p274 = por %p272, %p273
      %s276 = sadd.s32 %s275, 1
      %p279 = scmp.eq.s32.totalorder %s26, 1
      %p280 = scmp.ne.s32.totalorder %s275, %s277
      %p281 = scmp.eq.s32.totalorder %s26, 0
      %p282 = por %p280, %p281
      %p283 = scmp.ne.s32.totalorder %s275, %s277
      %p284 = scmp.eq.s32.totalorder %s31, 1
      %p285 = por %p283, %p284
      %p286 = scmp.ne.s32.totalorder %s277, %s278
      %p287 = scmp.eq.s32.totalorder %s31, 0
      %p288 = por %p286, %p287
      %p289 = scmp.ne.s32.totalorder %s277, %s278
      %p290 = scmp.eq.s32.totalorder %s32, 1
      %p291 = por %p289, %p290
      %p293 = scmp.ne.s32.totalorder %s278, %s292
      %p294 = scmp.eq.s32.totalorder %s32, 0
      %p295 = por %p293, %p294
      %s297 = sadd.s32 %s296, 1
      %p300 = scmp.eq.s32.totalorder %s26, 1
      %p301 = scmp.ne.s32.totalorder %s296, %s298
      %p302 = scmp.eq.s32.totalorder %s26, 0
      %p303 = por %p301, %p302
      %p304 = scmp.ne.s32.totalorder %s296, %s298
      %p305 = scmp.eq.s32.totalorder %s31, 1
      %p306 = por %p304, %p305
      %p307 = scmp.ne.s32.totalorder %s298, %s299
      %p308 = scmp.eq.s32.totalorder %s31, 0
      %p309 = por %p307, %p308
      %p310 = scmp.ne.s32.totalorder %s298, %s299
      %p311 = scmp.eq.s32.totalorder %s32, 1
      %p312 = por %p310, %p311
      %p314 = scmp.ne.s32.totalorder %s299, %s313
      %p315 = scmp.eq.s32.totalorder %s32, 0
      %p316 = por %p314, %p315
      %s318 = sadd.s32 %s317, 1
      %p321 = scmp.eq.s32.totalorder %s26, 1
      %p322 = scmp.ne.s32.totalorder %s317, %s319
      %p323 = scmp.eq.s32.totalorder %s26, 0
      %p324 = por %p322, %p323
      %p325 = scmp.ne.s32.totalorder %s317, %s319
      %p326 = scmp.eq.s32.totalorder %s31, 1
      %p327 = por %p325, %p326
      %p328 = scmp.ne.s32.totalorder %s319, %s320
      %p329 = scmp.eq.s32.totalorder %s31, 0
      %p330 = por %p328, %p329
      %p331 = scmp.ne.s32.totalorder %s319, %s320
      %p332 = scmp.eq.s32.totalorder %s32, 1
      %p333 = por %p331, %p332
      %p335 = scmp.ne.s32.totalorder %s320, %s334
      %p336 = scmp.eq.s32.totalorder %s32, 0
      %p337 = por %p335, %p336
      %s338 = ssub.s32 %s26, %s33
      %p339 = scmp.eq.s32.totalorder %s338, 0
      %s341 = sadd.s32 %s340, 1
      %s342 = scalar_select %p339, %s340, %s341
      %p345 = pneg %p339
      %p346 = scmp.eq.s32.totalorder %s26, 1
      %p347 = por %p345, %p346
      %p348 = scmp.ne.s32.totalorder %s340, %s343
      %p349 = scmp.eq.s32.totalorder %s26, 0
      %p350 = por %p348, %p349
      %p351 = scmp.ne.s32.totalorder %s340, %s343
      %p352 = scmp.eq.s32.totalorder %s31, 1
      %p353 = por %p351, %p352
      %p354 = scmp.ne.s32.totalorder %s343, %s344
      %p355 = scmp.eq.s32.totalorder %s31, 0
      %p356 = por %p354, %p355
      %p357 = scmp.ne.s32.totalorder %s343, %s344
      %p358 = scmp.eq.s32.totalorder %s32, 1
      %p359 = por %p357, %p358
      %p361 = scmp.ne.s32.totalorder %s344, %s360
      %p362 = scmp.eq.s32.totalorder %s32, 0
      %p363 = por %p361, %p362
      %p364 = scmp.le.s32.totalorder 1, %s26
      %p365 = scmp.lt.s32.totalorder %s26, 3
      %p366 = pnand %p364, %p365
      %p367 = pneg %p366
      // Predicated region
      $region9: #{tpu_custom_call.1} parent=5 // pred_check
        _
      $region10: #{tpu_custom_call.1} parent=5 // pred_check_branch
        %369 = sbr.rel (%p366) target = $region12
      $region11: #{tpu_custom_call.1} parent=5 // pred_region
        %s370 = ssub.s32 %s26, 1
        // Predicated region
        $region13: #{tpu_custom_call.1} parent=11 // pred_check
          %p371 = pneg %p99
        $region14: #{tpu_custom_call.1} parent=11 // pred_check_branch
          %373 = sbr.rel (%p371) target = $region16
        $region15: #{tpu_custom_call.1} parent=11 // pred_region
          _
        $region16: #{tpu_custom_call.1} parent=11 // pred_fallthru
          _
        // Predicated region
        $region17: #{tpu_custom_call.1} parent=11 // pred_check
          %p374 = pneg %p120
        $region18: #{tpu_custom_call.1} parent=11 // pred_check_branch
          %376 = sbr.rel (%p374) target = $region20
        $region19: #{tpu_custom_call.1} parent=11 // pred_region
          _
        $region20: #{tpu_custom_call.1} parent=11 // pred_fallthru
          _
        // Predicated region
        $region21: #{tpu_custom_call.1} parent=11 // pred_check
          %p377 = pneg %p141
        $region22: #{tpu_custom_call.1} parent=11 // pred_check_branch
          %379 = sbr.rel (%p377) target = $region24
        $region23: #{tpu_custom_call.1} parent=11 // pred_region
          %s381 = ssub.s32 256, 256
          %382 = vsyncadd [#allocation3], %s381
          %s383 = sshll.u32 [#allocation2], 4
          %s384 = int_to_ptr.vmem [resolvable:$true] %s383
          %389 = dma.hbm_to_vmem [thread:$0]  %s4, 256, %s384, [#allocation3], 64, 64, 4
        $region24: #{tpu_custom_call.1} parent=11 // pred_fallthru
          _
        // Predicated region
        $region25: #{tpu_custom_call.1} parent=11 // pred_check
          %p390 = pneg %p162
        $region26: #{tpu_custom_call.1} parent=11 // pred_check_branch
          %392 = sbr.rel (%p390) target = $region28
        $region27: #{tpu_custom_call.1} parent=11 // pred_region
          _
        $region28: #{tpu_custom_call.1} parent=11 // pred_fallthru
          _
        // Predicated region
        $region29: #{tpu_custom_call.1} parent=11 // pred_check
          %p393 = pneg %p183
        $region30: #{tpu_custom_call.1} parent=11 // pred_check_branch
          %395 = sbr.rel (%p393) target = $region32
        $region31: #{tpu_custom_call.1} parent=11 // pred_region
          %s397 = ssub.s32 16, 16
          %398 = vsyncadd [#allocation6], %s397
          %s400 = sshll.u32 [#allocation5], 4
          %s401 = int_to_ptr.vmem [resolvable:$true] %s400
          %403 = dma.hbm_to_vmem [thread:$0]  %s6, 16, %s401, [#allocation6]
        $region32: #{tpu_custom_call.1} parent=11 // pred_fallthru
          _
        // Predicated region
        $region33: #{tpu_custom_call.1} parent=11 // pred_check
          %p404 = pneg %p204
        $region34: #{tpu_custom_call.1} parent=11 // pred_check_branch
          %406 = sbr.rel (%p404) target = $region36
        $region35: #{tpu_custom_call.1} parent=11 // pred_region
          %s408 = ssub.s32 16, 16
          %409 = vsyncadd [#allocation6], %s408
          %s411 = sshll.u32 [#allocation7], 4
          %s412 = int_to_ptr.vmem [resolvable:$true] %s411
          %414 = dma.hbm_to_vmem [thread:$0]  %s7, 16, %s412, [#allocation6]
        $region36: #{tpu_custom_call.1} parent=11 // pred_fallthru
          _
        // Predicated region
        $region37: #{tpu_custom_call.1} parent=11 // pred_check
          %p415 = pneg %p225
        $region38: #{tpu_custom_call.1} parent=11 // pred_check_branch
          %417 = sbr.rel (%p415) target = $region40
        $region39: #{tpu_custom_call.1} parent=11 // pred_region
          %s419 = ssub.s32 16, 16
          %420 = vsyncadd [#allocation9], %s419
          %s422 = sshll.u32 [#allocation8], 4
          %s423 = int_to_ptr.vmem [resolvable:$true] %s422
          %425 = dma.hbm_to_vmem [thread:$0]  %s8, 16, %s423, [#allocation9]
        $region40: #{tpu_custom_call.1} parent=11 // pred_fallthru
          _
        // Predicated region
        $region41: #{tpu_custom_call.1} parent=11 // pred_check
          %p426 = pneg %p246
        $region42: #{tpu_custom_call.1} parent=11 // pred_check_branch
          %428 = sbr.rel (%p426) target = $region44
        $region43: #{tpu_custom_call.1} parent=11 // pred_region
          %s430 = ssub.s32 16, 16
          %431 = vsyncadd [#allocation9], %s430
          %s433 = sshll.u32 [#allocation10], 4
          %s434 = int_to_ptr.vmem [resolvable:$true] %s433
          %436 = dma.hbm_to_vmem [thread:$0]  %s9, 16, %s434, [#allocation9]
        $region44: #{tpu_custom_call.1} parent=11 // pred_fallthru
          _
        // Predicated region
        $region45: #{tpu_custom_call.1} parent=11 // pred_check
          %p437 = pneg %p267
        $region46: #{tpu_custom_call.1} parent=11 // pred_check_branch
          %439 = sbr.rel (%p437) target = $region48
        $region47: #{tpu_custom_call.1} parent=11 // pred_region
          _
        $region48: #{tpu_custom_call.1} parent=11 // pred_fallthru
          _
        // Predicated region
        $region49: #{tpu_custom_call.1} parent=11 // pred_check
          %p440 = pneg %p288
        $region50: #{tpu_custom_call.1} parent=11 // pred_check_branch
          %442 = sbr.rel (%p440) target = $region52
        $region51: #{tpu_custom_call.1} parent=11 // pred_region
          _
        $region52: #{tpu_custom_call.1} parent=11 // pred_fallthru
          _
        // Predicated region
        $region53: #{tpu_custom_call.1} parent=11 // pred_check
          %p443 = pneg %p309
        $region54: #{tpu_custom_call.1} parent=11 // pred_check_branch
          %445 = sbr.rel (%p443) target = $region56
        $region55: #{tpu_custom_call.1} parent=11 // pred_region
          _
        $region56: #{tpu_custom_call.1} parent=11 // pred_fallthru
          _
        // Predicated region
        $region57: #{tpu_custom_call.1} parent=11 // pred_check
          %p446 = pneg %p330
        $region58: #{tpu_custom_call.1} parent=11 // pred_check_branch
          %448 = sbr.rel (%p446) target = $region60
        $region59: #{tpu_custom_call.1} parent=11 // pred_region
          _
        $region60: #{tpu_custom_call.1} parent=11 // pred_fallthru
          _
      $region12: #{tpu_custom_call.1} parent=5 // pred_fallthru
        _
      %p449 = scmp.lt.s32.totalorder %s26, 2
      // Predicated region
      $region61: #{tpu_custom_call.1} parent=5 // pred_check
        %p450 = pneg %p449
      $region62: #{tpu_custom_call.1} parent=5 // pred_check_branch
        %452 = sbr.rel (%p450) target = $region64
      $region63: #{tpu_custom_call.1} parent=5 // pred_region
        // Predicated region
        $region65: #{tpu_custom_call.1} parent=63 // pred_check
          %p453 = pneg %p46
        $region66: #{tpu_custom_call.1} parent=63 // pred_check_branch
          %455 = sbr.rel (%p453) target = $region68
        $region67: #{tpu_custom_call.1} parent=63 // pred_region
          %p456 = scmp.lt.s32.totalorder %s26, 1
          %s457 = scalar_select %p456, %s26, 1
          %s458 = smul.addr %s457, 8
          %s459 = scalar_lea.vmem %s0, %s458
        $region68: #{tpu_custom_call.1} parent=63 // pred_fallthru
          _
        // Predicated region
        $region69: #{tpu_custom_call.1} parent=63 // pred_check
          %p460 = pneg %p72
        $region70: #{tpu_custom_call.1} parent=63 // pred_check_branch
          %462 = sbr.rel (%p460) target = $region72
        $region71: #{tpu_custom_call.1} parent=63 // pred_region
          %p463 = scmp.lt.s32.totalorder %s26, 1
          %s464 = scalar_select %p463, %s26, 1
          %s465 = smul.addr %s464, 8
          %s466 = scalar_lea.vmem %s1, %s465
        $region72: #{tpu_custom_call.1} parent=63 // pred_fallthru
          _
      $region64: #{tpu_custom_call.1} parent=5 // pred_fallthru
        _
      %p467 = scmp.le.s32.totalorder 1, %s26
      %p468 = scmp.lt.s32.totalorder %s26, 3
      %p469 = pnand %p467, %p468
      %p470 = pneg %p469
      // Predicated region
      $region73: #{tpu_custom_call.1} parent=5 // pred_check
        _
      $region74: #{tpu_custom_call.1} parent=5 // pred_check_branch
        %472 = sbr.rel (%p469) target = $region76
      $region75: #{tpu_custom_call.1} parent=5 // pred_region
        %s473 = ssub.s32 %s26, 1
        // Predicated region
        $region77: #{tpu_custom_call.1} parent=75 // pred_check
          %p474 = pneg %p141
        $region78: #{tpu_custom_call.1} parent=75 // pred_check_branch
          %476 = sbr.rel (%p474) target = $region80
        $region79: #{tpu_custom_call.1} parent=75 // pred_region
          %477 = dma.done [#allocation3], 256
        $region80: #{tpu_custom_call.1} parent=75 // pred_fallthru
          _
        // Predicated region
        $region81: #{tpu_custom_call.1} parent=75 // pred_check
          %p478 = pneg %p183
        $region82: #{tpu_custom_call.1} parent=75 // pred_check_branch
          %480 = sbr.rel (%p478) target = $region84
        $region83: #{tpu_custom_call.1} parent=75 // pred_region
          %481 = dma.done [#allocation6], 16
        $region84: #{tpu_custom_call.1} parent=75 // pred_fallthru
          _
        // Predicated region
        $region85: #{tpu_custom_call.1} parent=75 // pred_check
          %p482 = pneg %p204
        $region86: #{tpu_custom_call.1} parent=75 // pred_check_branch
          %484 = sbr.rel (%p482) target = $region88
        $region87: #{tpu_custom_call.1} parent=75 // pred_region
          %485 = dma.done [#allocation6], 16
        $region88: #{tpu_custom_call.1} parent=75 // pred_fallthru
          _
        // Predicated region
        $region89: #{tpu_custom_call.1} parent=75 // pred_check
          %p486 = pneg %p225
        $region90: #{tpu_custom_call.1} parent=75 // pred_check_branch
          %488 = sbr.rel (%p486) target = $region92
        $region91: #{tpu_custom_call.1} parent=75 // pred_region
          %489 = dma.done [#allocation9], 16
        $region92: #{tpu_custom_call.1} parent=75 // pred_fallthru
          _
        // Predicated region
        $region93: #{tpu_custom_call.1} parent=75 // pred_check
          %p490 = pneg %p246
        $region94: #{tpu_custom_call.1} parent=75 // pred_check_branch
          %492 = sbr.rel (%p490) target = $region96
        $region95: #{tpu_custom_call.1} parent=75 // pred_region
          %493 = dma.done [#allocation9], 16
        $region96: #{tpu_custom_call.1} parent=75 // pred_fallthru
          _
        %p494 = scmp.lt.s32.totalorder %s31, 1
        %s495 = scalar_select %p494, %s31, 1
        %s496 = smul.addr %s495, 8
        %s497 = scalar_lea.vmem %s0, %s496
        %p498 = pneg %p52
        %p499 = pneg %p49
        %p500 = scmp.lt.s32.totalorder %s31, 1
        %s501 = scalar_select %p500, %s31, 1
        %s502 = smul.addr %s501, 8
        %s503 = scalar_lea.vmem %s1, %s502
        %p504 = pneg %p78
        %p505 = pneg %p75
        %p506 = pneg %p99
        %p507 = pneg %p96
        %p508 = pneg %p120
        %p509 = pneg %p117
        %p510 = pneg %p141
        %p511 = pneg %p138
        %p512 = pneg %p162
        %p513 = pneg %p159
        %p514 = pneg %p183
        %p515 = pneg %p180
        %p516 = pneg %p204
        %p517 = pneg %p201
        %p518 = pneg %p225
        %p519 = pneg %p222
        %p520 = pneg %p246
        %p521 = pneg %p243
        %p522 = pneg %p267
        %p523 = pneg %p264
        %p524 = pneg %p288
        %p525 = pneg %p285
        %p526 = pneg %p309
        %p527 = pneg %p306
        %p528 = pneg %p330
        %p529 = pneg %p327
        %p530 = pneg %p356
        %p531 = pneg %p353
        %s532 = sand.u32 %s343, 1
        %s533 = scalar_lea.sflag [#allocation4], %s532
        %s534 = sand.u32 %s343, 1
        %s535 = smul.addr %s534, 8
        %s536 = scalar_lea.vmem [#allocation11], %s535
        %p537 = scmp.lt.s32.totalorder %s31, 1
        %s538 = scalar_select %p537, %s31, 1
        %s539 = smul.addr %s538, 8
        %s540 = scalar_lea.vmem %s0, %s539
        %p541 = scmp.lt.s32.totalorder %s31, 1
        %s542 = scalar_select %p541, %s31, 1
        %s543 = smul.addr %s542, 8
        %s544 = scalar_lea.vmem %s1, %s543
        %v546 = vld [vmem:[%s540] sm:$0xff]
        %v547 = vld [vmem:[%s544] sm:$0xff]
        %v548 = vld [vmem:[%s2] sm:$0xf]
        %v549 = vld [vmem:[%s2 + $0x4] sm:$0xf]
        %v550 = vld [vmem:[%s2 + $0x8] sm:$0xf]
        %v551 = vld [vmem:[%s2 + $0xc] sm:$0xf]
        %v552 = vld [vmem:[%s3] sm:$0x1]
        %v553 = vld [vmem:[#allocation2] sm:$0xf]
        %v554 = vld [vmem:[#allocation2 + $0x4] sm:$0xf]
        %v555 = vld [vmem:[#allocation2 + $0x8] sm:$0xf]
        %v556 = vld [vmem:[#allocation2 + $0xc] sm:$0xf]
        %v557 = vld [vmem:[%s5] sm:$0x1]
        %v558 = vld [vmem:[%s10] sm:$0xf]
        %v559 = vld [vmem:[%s10 + $0x4] sm:$0xf]
        %v560 = vld [vmem:[%s10 + $0x8] sm:$0xf]
        %v561 = vld [vmem:[%s10 + $0xc] sm:$0xf]
        %v562 = vld [vmem:[%s11] sm:$0x1]
        %v563 = vld [vmem:[%s12] sm:$0xf]
        %v564 = vld [vmem:[%s12 + $0x4] sm:$0xf]
        %v565 = vld [vmem:[%s12 + $0x8] sm:$0xf]
        %v566 = vld [vmem:[%s12 + $0xc] sm:$0xf]
        %v567 = vld [vmem:[%s12 + $0x10] sm:$0xf]
        %v568 = vld [vmem:[%s12 + $0x14] sm:$0xf]
        %v569 = vld [vmem:[%s12 + $0x18] sm:$0xf]
        %v570 = vld [vmem:[%s12 + $0x1c] sm:$0xf]
        %v571 = vld [vmem:[%s13] sm:$0x1]
        %v572 = vld [vmem:[#allocation5] sm:$0x1]
        %v573 = vld [vmem:[#allocation7] sm:$0x1]
        %v574 = vld [vmem:[#allocation8] sm:$0x1]
        %v575 = vld [vmem:[#allocation10] sm:$0x1]
        %v576 = vpack.c.bf16 %v546, %v546
        %v578 = vlaneseq
        %v579 = vshrl.u32 %v578, 7
        %v580 = vsub.s32 0, %v579
        %v581 = vrot.slane %v552, %v580
        %v587 = vunpack.c.l.b16 %v548
        %v588 = vunpack.c.l.b16 %v549
        %v589 = vunpack.c.l.b16 %v550
        %v590 = vunpack.c.l.b16 %v551
        %v591 = vpack.c.b16 %v588, %v587
        %v592 = vpack.c.b16 %v590, %v589
        %vm595 = vcmask 261120
        %v597 = vsel %vm595, %v576, 0
        %599 = vmatprep.subr.bf16.mxu0 0
        %600 = vmatpush1.bf16.msra.mxu0 %v591
        %601 = vmatprep.subr.bf16.mxu0 0
        %602 = vmatpush1.bf16.msra.mxu0 %v592
        %603 = vmatprep.subr.bf16.mxu0 0
        %604 = vmatpush1.bf16.msra.mxu0 0
        %605 = vmatprep.subr.bf16.mxu0 0
        %606 = vmatpush1.bf16.msra.mxu0 0
        %607 = vmatprep.subr.bf16.mxu0 0
        %608 = vmatpush1.bf16.msra.mxu0 0
        %609 = vmatprep.subr.bf16.mxu0 0
        %610 = vmatpush1.bf16.msra.mxu0 0
        %611 = vmatprep.subr.bf16.mxu0 0
        %612 = vmatpush1.bf16.msra.mxu0 0
        %613 = vmatprep.subr.bf16.mxu0 0
        %614 = vmatpush1.bf16.msra.mxu0 0
        %615 = vmatprep.subr.bf16.mxu0 0
        %616 = vmatpush1.bf16.msra.mxu0 0
        %617 = vmatprep.subr.bf16.mxu0 0
        %618 = vmatpush1.bf16.msra.mxu0 0
        %619 = vmatprep.subr.bf16.mxu0 0
        %620 = vmatpush1.bf16.msra.mxu0 0
        %621 = vmatprep.subr.bf16.mxu0 0
        %622 = vmatpush1.bf16.msra.mxu0 0
        %623 = vmatprep.subr.bf16.mxu0 0
        %624 = vmatpush1.bf16.msra.mxu0 0
        %625 = vmatprep.subr.bf16.mxu0 0
        %626 = vmatpush1.bf16.msra.mxu0 0
        %627 = vmatprep.subr.bf16.mxu0 0
        %628 = vmatpush1.bf16.msra.mxu0 0
        %629 = vmatprep.subr.bf16.mxu0 0
        %630 = vmatpush1.bf16.msra.mxu0 0
        %631 = vmatprep.mubr.bf16.mxu0 0
        %632 = vmatmul.mubr.bf16.gmra.mrb[0].mxu0 %v597
        %v633 = vpop.f32.mrb[0].mxu0
        %v634 = vadd.f32 %v581, %v633
        %v635 = vpop.f32.mrb[0].mxu0
        %v636 = vpop.f32.mrb[0].mxu0
        %v637 = vpop.f32.mrb[0].mxu0
        %638 = vdwg.mxu0
        %v639 = vpack.c.bf16 %v634, %v634
        %641 = vrot.lane.b32.xlu0 %v639, 96
        %v642 = vpop.permute.xlu0 %641
        %vm643 = vcmask 64512
        %v645 = vsel %vm643, %v639, 0
        %v648 = vsel %vm643, %v642, 0
        %650 = vmatprep.subr.bf16.mxu0 0
        %651 = vmatpush1.bf16.xpose.msra.mxu0 %v648
        %652 = vmatprep.subr.bf16.mxu0 0
        %653 = vmatpush1.bf16.xpose.msra.mxu0 0
        %654 = vmatprep.subr.bf16.mxu0 0
        %655 = vmatpush1.bf16.xpose.msra.mxu0 0
        %656 = vmatprep.subr.bf16.mxu0 0
        %657 = vmatpush1.bf16.xpose.msra.mxu0 0
        %658 = vmatprep.subr.bf16.mxu0 0
        %659 = vmatpush1.bf16.xpose.msra.mxu0 0
        %660 = vmatprep.subr.bf16.mxu0 0
        %661 = vmatpush1.bf16.xpose.msra.mxu0 0
        %662 = vmatprep.subr.bf16.mxu0 0
        %663 = vmatpush1.bf16.xpose.msra.mxu0 0
        %664 = vmatprep.subr.bf16.mxu0 0
        %665 = vmatpush1.bf16.xpose.msra.mxu0 0
        %666 = vmatprep.subr.bf16.mxu0 0
        %667 = vmatpush1.bf16.xpose.msra.mxu0 0
        %668 = vmatprep.subr.bf16.mxu0 0
        %669 = vmatpush1.bf16.xpose.msra.mxu0 0
        %670 = vmatprep.subr.bf16.mxu0 0
        %671 = vmatpush1.bf16.xpose.msra.mxu0 0
        %672 = vmatprep.subr.bf16.mxu0 0
        %673 = vmatpush1.bf16.xpose.msra.mxu0 0
        %674 = vmatprep.subr.bf16.mxu0 0
        %675 = vmatpush1.bf16.xpose.msra.mxu0 0
        %676 = vmatprep.subr.bf16.mxu0 0
        %677 = vmatpush1.bf16.xpose.msra.mxu0 0
        %678 = vmatprep.subr.bf16.mxu0 0
        %679 = vmatpush1.bf16.xpose.msra.mxu0 0
        %680 = vmatprep.subr.bf16.mxu0 0
        %681 = vmatpush1.bf16.xpose.msra.mxu0 0
        %682 = vmatprep.mubr.bf16.mxu0 0
        %683 = vmatmul.mubr.bf16.gmra.mrb[0].mxu0 %v645
        %v684 = vpop.f32.mrb[0].mxu0
        %v685 = vadd.f32 %v547, %v684
        %v686 = vpop.f32.mrb[0].mxu0
        %v687 = vpop.f32.mrb[0].mxu0
        %v688 = vpop.f32.mrb[0].mxu0
        %689 = vdwg.mxu0
        %v690 = vsel %vm643, %v685, -inf
        %691 = vmax.xlane.f32.xlu0 %v690
        %v692 = vpop.xlane.xlu0 %691
        %v693 = vsub.f32 %v685, %v692
        %v694 = vmul.f32 %v693, 1.442695
        %v695 = vpow.pop %v694
        %v696 = vsel %vm643, %v695, 0.0
        %697 = vadd.xlane.f32.xlu0 %v696
        %v698 = vpop.xlane.xlu0 %697
        %v699 = vrcp.pop %v698
        %v700 = vmul.f32 %v695, %v699
        %v701 = vpack.c.bf16 %v700, %v700
        %702 = vrot.lane.b32.xlu0 %v639, 64
        %v703 = vpop.permute.xlu0 %702
        %v705 = vsel %vm643, %v701, 0
        %vm707 = vcmask 1043456
        %v709 = vsel %vm707, %v703, 0
        %711 = vmatprep.subr.bf16.mxu0 0
        %712 = vmatpush1.bf16.msra.mxu0 %v709
        %713 = vmatprep.subr.bf16.mxu0 0
        %714 = vmatpush1.bf16.msra.mxu0 0
        %715 = vmatprep.subr.bf16.mxu0 0
        %716 = vmatpush1.bf16.msra.mxu0 0
        %717 = vmatprep.subr.bf16.mxu0 0
        %718 = vmatpush1.bf16.msra.mxu0 0
        %719 = vmatprep.subr.bf16.mxu0 0
        %720 = vmatpush1.bf16.msra.mxu0 0
        %721 = vmatprep.subr.bf16.mxu0 0
        %722 = vmatpush1.bf16.msra.mxu0 0
        %723 = vmatprep.subr.bf16.mxu0 0
        %724 = vmatpush1.bf16.msra.mxu0 0
        %725 = vmatprep.subr.bf16.mxu0 0
        %726 = vmatpush1.bf16.msra.mxu0 0
        %727 = vmatprep.subr.bf16.mxu0 0
        %728 = vmatpush1.bf16.msra.mxu0 0
        %729 = vmatprep.subr.bf16.mxu0 0
        %730 = vmatpush1.bf16.msra.mxu0 0
        %731 = vmatprep.subr.bf16.mxu0 0
        %732 = vmatpush1.bf16.msra.mxu0 0
        %733 = vmatprep.subr.bf16.mxu0 0
        %734 = vmatpush1.bf16.msra.mxu0 0
        %735 = vmatprep.subr.bf16.mxu0 0
        %736 = vmatpush1.bf16.msra.mxu0 0
        %737 = vmatprep.subr.bf16.mxu0 0
        %738 = vmatpush1.bf16.msra.mxu0 0
        %739 = vmatprep.subr.bf16.mxu0 0
        %740 = vmatpush1.bf16.msra.mxu0 0
        %741 = vmatprep.subr.bf16.mxu0 0
        %742 = vmatpush1.bf16.msra.mxu0 0
        %743 = vmatprep.mubr.bf16.mxu0 0
        %744 = vmatmul.mubr.bf16.gmra.mrb[0].mxu0 %v705
        %v745 = vpop.f32.mrb[0].mxu0
        %v746 = vadd.f32 0.0, %v745
        %v747 = vpop.f32.mrb[0].mxu0
        %v748 = vpop.f32.mrb[0].mxu0
        %v749 = vpop.f32.mrb[0].mxu0
        %750 = vdwg.mxu0
        %751 = vrot.lane.b32.xlu0 %v639, 120
        %v752 = vpop.permute.xlu0 %751
        %753 = vrot.lane.b32.xlu0 %v639, 88
        %v754 = vpop.permute.xlu0 %753
        %v756 = vsel %vm643, %v752, 0
        %v759 = vsel %vm643, %v754, 0
        %761 = vmatprep.subr.bf16.mxu0 0
        %762 = vmatpush1.bf16.xpose.msra.mxu0 %v759
        %763 = vmatprep.subr.bf16.mxu0 0
        %764 = vmatpush1.bf16.xpose.msra.mxu0 0
        %765 = vmatprep.subr.bf16.mxu0 0
        %766 = vmatpush1.bf16.xpose.msra.mxu0 0
        %767 = vmatprep.subr.bf16.mxu0 0
        %768 = vmatpush1.bf16.xpose.msra.mxu0 0
        %769 = vmatprep.subr.bf16.mxu0 0
        %770 = vmatpush1.bf16.xpose.msra.mxu0 0
        %771 = vmatprep.subr.bf16.mxu0 0
        %772 = vmatpush1.bf16.xpose.msra.mxu0 0
        %773 = vmatprep.subr.bf16.mxu0 0
        %774 = vmatpush1.bf16.xpose.msra.mxu0 0
        %775 = vmatprep.subr.bf16.mxu0 0
        %776 = vmatpush1.bf16.xpose.msra.mxu0 0
        %777 = vmatprep.subr.bf16.mxu0 0
        %778 = vmatpush1.bf16.xpose.msra.mxu0 0
        %779 = vmatprep.subr.bf16.mxu0 0
        %780 = vmatpush1.bf16.xpose.msra.mxu0 0
        %781 = vmatprep.subr.bf16.mxu0 0
        %782 = vmatpush1.bf16.xpose.msra.mxu0 0
        %783 = vmatprep.subr.bf16.mxu0 0
        %784 = vmatpush1.bf16.xpose.msra.mxu0 0
        %785 = vmatprep.subr.bf16.mxu0 0
        %786 = vmatpush1.bf16.xpose.msra.mxu0 0
        %787 = vmatprep.subr.bf16.mxu0 0
        %788 = vmatpush1.bf16.xpose.msra.mxu0 0
        %789 = vmatprep.subr.bf16.mxu0 0
        %790 = vmatpush1.bf16.xpose.msra.mxu0 0
        %791 = vmatprep.subr.bf16.mxu0 0
        %792 = vmatpush1.bf16.xpose.msra.mxu0 0
        %793 = vmatprep.mubr.bf16.mxu0 0
        %794 = vmatmul.mubr.bf16.gmra.mrb[0].mxu0 %v756
        %v795 = vpop.f32.mrb[0].mxu0
        %v796 = vadd.f32 %v547, %v795
        %v797 = vpop.f32.mrb[0].mxu0
        %v798 = vpop.f32.mrb[0].mxu0
        %v799 = vpop.f32.mrb[0].mxu0
        %800 = vdwg.mxu0
        %v801 = vsel %vm643, %v796, -inf
        %802 = vmax.xlane.f32.xlu0 %v801
        %v803 = vpop.xlane.xlu0 %802
        %v804 = vsub.f32 %v796, %v803
        %v805 = vmul.f32 %v804, 1.442695
        %v806 = vpow.pop %v805
        %v807 = vsel %vm643, %v806, 0.0
        %808 = vadd.xlane.f32.xlu0 %v807
        %v809 = vpop.xlane.xlu0 %808
        %v810 = vrcp.pop %v809
        %v811 = vmul.f32 %v806, %v810
        %v812 = vpack.c.bf16 %v811, %v811
        %813 = vrot.lane.b32.xlu0 %v639, 56
        %v814 = vpop.permute.xlu0 %813
        %v816 = vsel %vm643, %v812, 0
        %v819 = vsel %vm707, %v814, 0
        %821 = vmatprep.subr.bf16.mxu0 0
        %822 = vmatpush1.bf16.msra.mxu0 %v819
        %823 = vmatprep.subr.bf16.mxu0 0
        %824 = vmatpush1.bf16.msra.mxu0 0
        %825 = vmatprep.subr.bf16.mxu0 0
        %826 = vmatpush1.bf16.msra.mxu0 0
        %827 = vmatprep.subr.bf16.mxu0 0
        %828 = vmatpush1.bf16.msra.mxu0 0
        %829 = vmatprep.subr.bf16.mxu0 0
        %830 = vmatpush1.bf16.msra.mxu0 0
        %831 = vmatprep.subr.bf16.mxu0 0
        %832 = vmatpush1.bf16.msra.mxu0 0
        %833 = vmatprep.subr.bf16.mxu0 0
        %834 = vmatpush1.bf16.msra.mxu0 0
        %835 = vmatprep.subr.bf16.mxu0 0
        %836 = vmatpush1.bf16.msra.mxu0 0
        %837 = vmatprep.subr.bf16.mxu0 0
        %838 = vmatpush1.bf16.msra.mxu0 0
        %839 = vmatprep.subr.bf16.mxu0 0
        %840 = vmatpush1.bf16.msra.mxu0 0
        %841 = vmatprep.subr.bf16.mxu0 0
        %842 = vmatpush1.bf16.msra.mxu0 0
        %843 = vmatprep.subr.bf16.mxu0 0
        %844 = vmatpush1.bf16.msra.mxu0 0
        %845 = vmatprep.subr.bf16.mxu0 0
        %846 = vmatpush1.bf16.msra.mxu0 0
        %847 = vmatprep.subr.bf16.mxu0 0
        %848 = vmatpush1.bf16.msra.mxu0 0
        %849 = vmatprep.subr.bf16.mxu0 0
        %850 = vmatpush1.bf16.msra.mxu0 0
        %851 = vmatprep.subr.bf16.mxu0 0
        %852 = vmatpush1.bf16.msra.mxu0 0
        %853 = vmatprep.mubr.bf16.mxu0 0
        %854 = vmatmul.mubr.bf16.gmra.mrb[0].mxu0 %v816
        %v855 = vpop.f32.mrb[0].mxu0
        %v856 = vadd.f32 0.0, %v855
        %v857 = vpop.f32.mrb[0].mxu0
        %v858 = vpop.f32.mrb[0].mxu0
        %v859 = vpop.f32.mrb[0].mxu0
        %860 = vdwg.mxu0
        %861 = vrot.lane.b32.xlu0 %v639, 112
        %v862 = vpop.permute.xlu0 %861
        %863 = vrot.lane.b32.xlu0 %v639, 80
        %v864 = vpop.permute.xlu0 %863
        %v866 = vsel %vm643, %v862, 0
        %v869 = vsel %vm643, %v864, 0
        %871 = vmatprep.subr.bf16.mxu0 0
        %872 = vmatpush1.bf16.xpose.msra.mxu0 %v869
        %873 = vmatprep.subr.bf16.mxu0 0
        %874 = vmatpush1.bf16.xpose.msra.mxu0 0
        %875 = vmatprep.subr.bf16.mxu0 0
        %876 = vmatpush1.bf16.xpose.msra.mxu0 0
        %877 = vmatprep.subr.bf16.mxu0 0
        %878 = vmatpush1.bf16.xpose.msra.mxu0 0
        %879 = vmatprep.subr.bf16.mxu0 0
        %880 = vmatpush1.bf16.xpose.msra.mxu0 0
        %881 = vmatprep.subr.bf16.mxu0 0
        %882 = vmatpush1.bf16.xpose.msra.mxu0 0
        %883 = vmatprep.subr.bf16.mxu0 0
        %884 = vmatpush1.bf16.xpose.msra.mxu0 0
        %885 = vmatprep.subr.bf16.mxu0 0
        %886 = vmatpush1.bf16.xpose.msra.mxu0 0
        %887 = vmatprep.subr.bf16.mxu0 0
        %888 = vmatpush1.bf16.xpose.msra.mxu0 0
        %889 = vmatprep.subr.bf16.mxu0 0
        %890 = vmatpush1.bf16.xpose.msra.mxu0 0
        %891 = vmatprep.subr.bf16.mxu0 0
        %892 = vmatpush1.bf16.xpose.msra.mxu0 0
        %893 = vmatprep.subr.bf16.mxu0 0
        %894 = vmatpush1.bf16.xpose.msra.mxu0 0
        %895 = vmatprep.subr.bf16.mxu0 0
        %896 = vmatpush1.bf16.xpose.msra.mxu0 0
        %897 = vmatprep.subr.bf16.mxu0 0
        %898 = vmatpush1.bf16.xpose.msra.mxu0 0
        %899 = vmatprep.subr.bf16.mxu0 0
        %900 = vmatpush1.bf16.xpose.msra.mxu0 0
        %901 = vmatprep.subr.bf16.mxu0 0
        %902 = vmatpush1.bf16.xpose.msra.mxu0 0
        %903 = vmatprep.mubr.bf16.mxu0 0
        %904 = vmatmul.mubr.bf16.gmra.mrb[0].mxu0 %v866
        %v905 = vpop.f32.mrb[0].mxu0
        %v906 = vadd.f32 %v547, %v905
        %v907 = vpop.f32.mrb[0].mxu0
        %v908 = vpop.f32.mrb[0].mxu0
        %v909 = vpop.f32.mrb[0].mxu0
        %910 = vdwg.mxu0
        %v911 = vsel %vm643, %v906, -inf
        %912 = vmax.xlane.f32.xlu0 %v911
        %v913 = vpop.xlane.xlu0 %912
        %v914 = vsub.f32 %v906, %v913
        %v915 = vmul.f32 %v914, 1.442695
        %v916 = vpow.pop %v915
        %v917 = vsel %vm643, %v916, 0.0
        %918 = vadd.xlane.f32.xlu0 %v917
        %v919 = vpop.xlane.xlu0 %918
        %v920 = vrcp.pop %v919
        %v921 = vmul.f32 %v916, %v920
        %v922 = vpack.c.bf16 %v921, %v921
        %923 = vrot.lane.b32.xlu0 %v639, 48
        %v924 = vpop.permute.xlu0 %923
        %v926 = vsel %vm643, %v922, 0
        %v929 = vsel %vm707, %v924, 0
        %931 = vmatprep.subr.bf16.mxu0 0
        %932 = vmatpush1.bf16.msra.mxu0 %v929
        %933 = vmatprep.subr.bf16.mxu0 0
        %934 = vmatpush1.bf16.msra.mxu0 0
        %935 = vmatprep.subr.bf16.mxu0 0
        %936 = vmatpush1.bf16.msra.mxu0 0
        %937 = vmatprep.subr.bf16.mxu0 0
        %938 = vmatpush1.bf16.msra.mxu0 0
        %939 = vmatprep.subr.bf16.mxu0 0
        %940 = vmatpush1.bf16.msra.mxu0 0
        %941 = vmatprep.subr.bf16.mxu0 0
        %942 = vmatpush1.bf16.msra.mxu0 0
        %943 = vmatprep.subr.bf16.mxu0 0
        %944 = vmatpush1.bf16.msra.mxu0 0
        %945 = vmatprep.subr.bf16.mxu0 0
        %946 = vmatpush1.bf16.msra.mxu0 0
        %947 = vmatprep.subr.bf16.mxu0 0
        %948 = vmatpush1.bf16.msra.mxu0 0
        %949 = vmatprep.subr.bf16.mxu0 0
        %950 = vmatpush1.bf16.msra.mxu0 0
        %951 = vmatprep.subr.bf16.mxu0 0
        %952 = vmatpush1.bf16.msra.mxu0 0
        %953 = vmatprep.subr.bf16.mxu0 0
        %954 = vmatpush1.bf16.msra.mxu0 0
        %955 = vmatprep.subr.bf16.mxu0 0
        %956 = vmatpush1.bf16.msra.mxu0 0
        %957 = vmatprep.subr.bf16.mxu0 0
        %958 = vmatpush1.bf16.msra.mxu0 0
        %959 = vmatprep.subr.bf16.mxu0 0
        %960 = vmatpush1.bf16.msra.mxu0 0
        %961 = vmatprep.subr.bf16.mxu0 0
        %962 = vmatpush1.bf16.msra.mxu0 0
        %963 = vmatprep.mubr.bf16.mxu0 0
        %964 = vmatmul.mubr.bf16.gmra.mrb[0].mxu0 %v926
        %v965 = vpop.f32.mrb[0].mxu0
        %v966 = vadd.f32 0.0, %v965
        %v967 = vpop.f32.mrb[0].mxu0
        %v968 = vpop.f32.mrb[0].mxu0
        %v969 = vpop.f32.mrb[0].mxu0
        %970 = vdwg.mxu0
        %971 = vrot.lane.b32.xlu0 %v639, 104
        %v972 = vpop.permute.xlu0 %971
        %973 = vrot.lane.b32.xlu0 %v639, 72
        %v974 = vpop.permute.xlu0 %973
        %v976 = vsel %vm643, %v972, 0
        %v979 = vsel %vm643, %v974, 0
        %981 = vmatprep.subr.bf16.mxu0 0
        %982 = vmatpush1.bf16.xpose.msra.mxu0 %v979
        %983 = vmatprep.subr.bf16.mxu0 0
        %984 = vmatpush1.bf16.xpose.msra.mxu0 0
        %985 = vmatprep.subr.bf16.mxu0 0
        %986 = vmatpush1.bf16.xpose.msra.mxu0 0
        %987 = vmatprep.subr.bf16.mxu0 0
        %988 = vmatpush1.bf16.xpose.msra.mxu0 0
        %989 = vmatprep.subr.bf16.mxu0 0
        %990 = vmatpush1.bf16.xpose.msra.mxu0 0
        %991 = vmatprep.subr.bf16.mxu0 0
        %992 = vmatpush1.bf16.xpose.msra.mxu0 0
        %993 = vmatprep.subr.bf16.mxu0 0
        %994 = vmatpush1.bf16.xpose.msra.mxu0 0
        %995 = vmatprep.subr.bf16.mxu0 0
        %996 = vmatpush1.bf16.xpose.msra.mxu0 0
        %997 = vmatprep.subr.bf16.mxu0 0
        %998 = vmatpush1.bf16.xpose.msra.mxu0 0
        %999 = vmatprep.subr.bf16.mxu0 0
        %1000 = vmatpush1.bf16.xpose.msra.mxu0 0
        %1001 = vmatprep.subr.bf16.mxu0 0
        %1002 = vmatpush1.bf16.xpose.msra.mxu0 0
        %1003 = vmatprep.subr.bf16.mxu0 0
        %1004 = vmatpush1.bf16.xpose.msra.mxu0 0
        %1005 = vmatprep.subr.bf16.mxu0 0
        %1006 = vmatpush1.bf16.xpose.msra.mxu0 0
        %1007 = vmatprep.subr.bf16.mxu0 0
        %1008 = vmatpush1.bf16.xpose.msra.mxu0 0
        %1009 = vmatprep.subr.bf16.mxu0 0
        %1010 = vmatpush1.bf16.xpose.msra.mxu0 0
        %1011 = vmatprep.subr.bf16.mxu0 0
        %1012 = vmatpush1.bf16.xpose.msra.mxu0 0
        %1013 = vmatprep.mubr.bf16.mxu0 0
        %1014 = vmatmul.mubr.bf16.gmra.mrb[0].mxu0 %v976
        %v1015 = vpop.f32.mrb[0].mxu0
        %v1016 = vadd.f32 %v547, %v1015
        %v1017 = vpop.f32.mrb[0].mxu0
        %v1018 = vpop.f32.mrb[0].mxu0
        %v1019 = vpop.f32.mrb[0].mxu0
        %1020 = vdwg.mxu0
        %v1021 = vsel %vm643, %v1016, -inf
        %1022 = vmax.xlane.f32.xlu0 %v1021
        %v1023 = vpop.xlane.xlu0 %1022
        %v1024 = vsub.f32 %v1016, %v1023
        %v1025 = vmul.f32 %v1024, 1.442695
        %v1026 = vpow.pop %v1025
        %v1027 = vsel %vm643, %v1026, 0.0
        %1028 = vadd.xlane.f32.xlu0 %v1027
        %v1029 = vpop.xlane.xlu0 %1028
        %v1030 = vrcp.pop %v1029
        %v1031 = vmul.f32 %v1026, %v1030
        %v1032 = vpack.c.bf16 %v1031, %v1031
        %1033 = vrot.lane.b32.xlu0 %v639, 40
        %v1034 = vpop.permute.xlu0 %1033
        %v1036 = vsel %vm643, %v1032, 0
        %v1039 = vsel %vm707, %v1034, 0
        %1041 = vmatprep.subr.bf16.mxu0 0
        %1042 = vmatpush1.bf16.msra.mxu0 %v1039
        %1043 = vmatprep.subr.bf16.mxu0 0
        %1044 = vmatpush1.bf16.msra.mxu0 0
        %1045 = vmatprep.subr.bf16.mxu0 0
        %1046 = vmatpush1.bf16.msra.mxu0 0
        %1047 = vmatprep.subr.bf16.mxu0 0
        %1048 = vmatpush1.bf16.msra.mxu0 0
        %1049 = vmatprep.subr.bf16.mxu0 0
        %1050 = vmatpush1.bf16.msra.mxu0 0
        %1051 = vmatprep.subr.bf16.mxu0 0
        %1052 = vmatpush1.bf16.msra.mxu0 0
        %1053 = vmatprep.subr.bf16.mxu0 0
        %1054 = vmatpush1.bf16.msra.mxu0 0
        %1055 = vmatprep.subr.bf16.mxu0 0
        %1056 = vmatpush1.bf16.msra.mxu0 0
        %1057 = vmatprep.subr.bf16.mxu0 0
        %1058 = vmatpush1.bf16.msra.mxu0 0
        %1059 = vmatprep.subr.bf16.mxu0 0
        %1060 = vmatpush1.bf16.msra.mxu0 0
        %1061 = vmatprep.subr.bf16.mxu0 0
        %1062 = vmatpush1.bf16.msra.mxu0 0
        %1063 = vmatprep.subr.bf16.mxu0 0
        %1064 = vmatpush1.bf16.msra.mxu0 0
        %1065 = vmatprep.subr.bf16.mxu0 0
        %1066 = vmatpush1.bf16.msra.mxu0 0
        %1067 = vmatprep.subr.bf16.mxu0 0
        %1068 = vmatpush1.bf16.msra.mxu0 0
        %1069 = vmatprep.subr.bf16.mxu0 0
        %1070 = vmatpush1.bf16.msra.mxu0 0
        %1071 = vmatprep.subr.bf16.mxu0 0
        %1072 = vmatpush1.bf16.msra.mxu0 0
        %1073 = vmatprep.mubr.bf16.mxu0 0
        %1074 = vmatmul.mubr.bf16.gmra.mrb[0].mxu0 %v1036
        %v1075 = vpop.f32.mrb[0].mxu0
        %v1076 = vadd.f32 0.0, %v1075
        %v1077 = vpop.f32.mrb[0].mxu0
        %v1078 = vpop.f32.mrb[0].mxu0
        %v1079 = vpop.f32.mrb[0].mxu0
        %1080 = vdwg.mxu0
        %1082 = vrot.lane.b32.xlu0 %v856, 8
        %v1083 = vpop.permute.xlu0 %1082
        %1086 = vrot.lane.b32.xlu0 %v966, 16
        %v1087 = vpop.permute.xlu0 %1086
        %1090 = vrot.lane.b32.xlu0 %v1076, 24
        %v1091 = vpop.permute.xlu0 %1090
        %v1093 = vsel %vm643, %v746, %v1083
        %vm1094 = vcmask 130048
        %v1095 = vsel %vm1094, %v1093, %v1087
        %vm1096 = vcmask 195584
        %v1097 = vsel %vm1096, %v1095, %v1091
        %v1098 = vpack.c.bf16 %v1097, %v1097
        %v1100 = vlaneseq
        %v1101 = vshrl.u32 %v1100, 7
        %v1102 = vsub.s32 0, %v1101
        %v1103 = vrot.slane %v557, %v1102
        %v1109 = vunpack.c.l.b16 %v553
        %v1110 = vunpack.c.l.b16 %v554
        %v1111 = vunpack.c.l.b16 %v555
        %v1112 = vunpack.c.l.b16 %v556
        %v1113 = vpack.c.b16 %v1110, %v1109
        %v1114 = vpack.c.b16 %v1112, %v1111
        %v1118 = vsel %vm595, %v1098, 0
        %1120 = vmatprep.subr.bf16.mxu0 0
        %1121 = vmatpush1.bf16.msra.mxu0 %v1113
        %1122 = vmatprep.subr.bf16.mxu0 0
        %1123 = vmatpush1.bf16.msra.mxu0 %v1114
        %1124 = vmatprep.subr.bf16.mxu0 0
        %1125 = vmatpush1.bf16.msra.mxu0 0
        %1126 = vmatprep.subr.bf16.mxu0 0
        %1127 = vmatpush1.bf16.msra.mxu0 0
        %1128 = vmatprep.subr.bf16.mxu0 0
        %1129 = vmatpush1.bf16.msra.mxu0 0
        %1130 = vmatprep.subr.bf16.mxu0 0
        %1131 = vmatpush1.bf16.msra.mxu0 0
        %1132 = vmatprep.subr.bf16.mxu0 0
        %1133 = vmatpush1.bf16.msra.mxu0 0
        %1134 = vmatprep.subr.bf16.mxu0 0
        %1135 = vmatpush1.bf16.msra.mxu0 0
        %1136 = vmatprep.subr.bf16.mxu0 0
        %1137 = vmatpush1.bf16.msra.mxu0 0
        %1138 = vmatprep.subr.bf16.mxu0 0
        %1139 = vmatpush1.bf16.msra.mxu0 0
        %1140 = vmatprep.subr.bf16.mxu0 0
        %1141 = vmatpush1.bf16.msra.mxu0 0
        %1142 = vmatprep.subr.bf16.mxu0 0
        %1143 = vmatpush1.bf16.msra.mxu0 0
        %1144 = vmatprep.subr.bf16.mxu0 0
        %1145 = vmatpush1.bf16.msra.mxu0 0
        %1146 = vmatprep.subr.bf16.mxu0 0
        %1147 = vmatpush1.bf16.msra.mxu0 0
        %1148 = vmatprep.subr.bf16.mxu0 0
        %1149 = vmatpush1.bf16.msra.mxu0 0
        %1150 = vmatprep.subr.bf16.mxu0 0
        %1151 = vmatpush1.bf16.msra.mxu0 0
        %1152 = vmatprep.mubr.bf16.mxu0 0
        %1153 = vmatmul.mubr.bf16.gmra.mrb[0].mxu0 %v1118
        %v1154 = vpop.f32.mrb[0].mxu0
        %v1155 = vadd.f32 %v1103, %v1154
        %v1156 = vpop.f32.mrb[0].mxu0
        %v1157 = vpop.f32.mrb[0].mxu0
        %v1158 = vpop.f32.mrb[0].mxu0
        %1159 = vdwg.mxu0
        %v1160 = vadd.f32 %v546, %v1155
        %v1161 = vsel %vm595, %v1160, 0.0
        %1162 = vadd.xlane.f32.xlu0 %v1161
        %v1163 = vpop.xlane.xlu0 %1162
        %v1164 = vrcp.pop 32.0
        %v1165 = vmul.f32 %v1163, %v1164
        %v1166 = vsub.f32 %v1160, %v1165
        %v1167 = vmul.f32 %v1166, %v1166
        %v1168 = vsel %vm595, %v1167, 0.0
        %1169 = vadd.xlane.f32.xlu0 %v1168
        %v1170 = vpop.xlane.xlu0 %1169
        %v1171 = vmul.f32 %v1170, %v1164
        %v1172 = vadd.f32 %v1171, 1e-05
        %v1173 = vrsqrt.pop %v1172
        %v1174 = vmul.f32 %v1166, %v1173
        %v1176 = vlaneseq
        %v1177 = vshrl.u32 %v1176, 7
        %v1178 = vsub.s32 0, %v1177
        %v1179 = vrot.slane %v572, %v1178
        %v1181 = vmul.f32 %v1174, %v1179
        %v1183 = vlaneseq
        %v1184 = vshrl.u32 %v1183, 7
        %v1185 = vsub.s32 0, %v1184
        %v1186 = vrot.slane %v573, %v1185
        %v1188 = vadd.f32 %v1181, %v1186
        %v1189 = vpack.c.bf16 %v1188, %v1188
        %v1191 = vlaneseq
        %v1192 = vshrl.u32 %v1191, 7
        %v1193 = vsub.s32 0, %v1192
        %v1194 = vrot.slane %v562, %v1193
        %v1200 = vunpack.c.l.b16 %v558
        %v1201 = vunpack.c.l.b16 %v559
        %v1202 = vunpack.c.l.b16 %v560
        %v1203 = vunpack.c.l.b16 %v561
        %v1204 = vpack.c.b16 %v1201, %v1200
        %v1205 = vpack.c.b16 %v1203, %v1202
        %v1209 = vsel %vm595, %v1189, 0
        %1211 = vmatprep.subr.bf16.mxu0 0
        %1212 = vmatpush1.bf16.msra.mxu0 %v1204
        %1213 = vmatprep.subr.bf16.mxu0 0
        %1214 = vmatpush1.bf16.msra.mxu0 %v1205
        %1215 = vmatprep.subr.bf16.mxu0 0
        %1216 = vmatpush1.bf16.msra.mxu0 0
        %1217 = vmatprep.subr.bf16.mxu0 0
        %1218 = vmatpush1.bf16.msra.mxu0 0
        %1219 = vmatprep.subr.bf16.mxu0 0
        %1220 = vmatpush1.bf16.msra.mxu0 0
        %1221 = vmatprep.subr.bf16.mxu0 0
        %1222 = vmatpush1.bf16.msra.mxu0 0
        %1223 = vmatprep.subr.bf16.mxu0 0
        %1224 = vmatpush1.bf16.msra.mxu0 0
        %1225 = vmatprep.subr.bf16.mxu0 0
        %1226 = vmatpush1.bf16.msra.mxu0 0
        %1227 = vmatprep.subr.bf16.mxu0 0
        %1228 = vmatpush1.bf16.msra.mxu0 0
        %1229 = vmatprep.subr.bf16.mxu0 0
        %1230 = vmatpush1.bf16.msra.mxu0 0
        %1231 = vmatprep.subr.bf16.mxu0 0
        %1232 = vmatpush1.bf16.msra.mxu0 0
        %1233 = vmatprep.subr.bf16.mxu0 0
        %1234 = vmatpush1.bf16.msra.mxu0 0
        %1235 = vmatprep.subr.bf16.mxu0 0
        %1236 = vmatpush1.bf16.msra.mxu0 0
        %1237 = vmatprep.subr.bf16.mxu0 0
        %1238 = vmatpush1.bf16.msra.mxu0 0
        %1239 = vmatprep.subr.bf16.mxu0 0
        %1240 = vmatpush1.bf16.msra.mxu0 0
        %1241 = vmatprep.subr.bf16.mxu0 0
        %1242 = vmatpush1.bf16.msra.mxu0 0
        %1243 = vmatprep.mubr.bf16.mxu0 0
        %1244 = vmatmul.mubr.bf16.gmra.mrb[0].mxu0 %v1209
        %v1245 = vpop.f32.mrb[0].mxu0
        %v1246 = vadd.f32 %v1194, %v1245
        %v1247 = vpop.f32.mrb[0].mxu0
        %v1248 = vpop.f32.mrb[0].mxu0
        %v1249 = vpop.f32.mrb[0].mxu0
        %1250 = vdwg.mxu0
        %v1251 = vmax.f32 %v1246, 0.0
        %v1252 = vpack.c.bf16 %v1251, %v1251
        %v1254 = vlaneseq
        %v1255 = vshrl.u32 %v1254, 7
        %v1256 = vsub.s32 0, %v1255
        %v1257 = vrot.slane %v571, %v1256
        %v1267 = vunpack.c.l.b16 %v563
        %v1268 = vunpack.c.l.b16 %v564
        %v1269 = vunpack.c.l.b16 %v565
        %v1270 = vunpack.c.l.b16 %v566
        %v1271 = vunpack.c.l.b16 %v567
        %v1272 = vunpack.c.l.b16 %v568
        %v1273 = vunpack.c.l.b16 %v569
        %v1274 = vunpack.c.l.b16 %v570
        %v1275 = vpack.c.b16 %v1268, %v1267
        %v1276 = vpack.c.b16 %v1270, %v1269
        %v1277 = vpack.c.b16 %v1272, %v1271
        %v1278 = vpack.c.b16 %v1274, %v1273
        %vm1283 = vcmask 523264
        %v1285 = vsel %vm1283, %v1252, 0
        %1287 = vmatprep.subr.bf16.mxu0 0
        %1288 = vmatpush1.bf16.msra.mxu0 %v1275
        %1289 = vmatprep.subr.bf16.mxu0 0
        %1290 = vmatpush1.bf16.msra.mxu0 %v1276
        %1291 = vmatprep.subr.bf16.mxu0 0
        %1292 = vmatpush1.bf16.msra.mxu0 %v1277
        %1293 = vmatprep.subr.bf16.mxu0 0
        %1294 = vmatpush1.bf16.msra.mxu0 %v1278
        %1295 = vmatprep.subr.bf16.mxu0 0
        %1296 = vmatpush1.bf16.msra.mxu0 0
        %1297 = vmatprep.subr.bf16.mxu0 0
        %1298 = vmatpush1.bf16.msra.mxu0 0
        %1299 = vmatprep.subr.bf16.mxu0 0
        %1300 = vmatpush1.bf16.msra.mxu0 0
        %1301 = vmatprep.subr.bf16.mxu0 0
        %1302 = vmatpush1.bf16.msra.mxu0 0
        %1303 = vmatprep.subr.bf16.mxu0 0
        %1304 = vmatpush1.bf16.msra.mxu0 0
        %1305 = vmatprep.subr.bf16.mxu0 0
        %1306 = vmatpush1.bf16.msra.mxu0 0
        %1307 = vmatprep.subr.bf16.mxu0 0
        %1308 = vmatpush1.bf16.msra.mxu0 0
        %1309 = vmatprep.subr.bf16.mxu0 0
        %1310 = vmatpush1.bf16.msra.mxu0 0
        %1311 = vmatprep.subr.bf16.mxu0 0
        %1312 = vmatpush1.bf16.msra.mxu0 0
        %1313 = vmatprep.subr.bf16.mxu0 0
        %1314 = vmatpush1.bf16.msra.mxu0 0
        %1315 = vmatprep.subr.bf16.mxu0 0
        %1316 = vmatpush1.bf16.msra.mxu0 0
        %1317 = vmatprep.subr.bf16.mxu0 0
        %1318 = vmatpush1.bf16.msra.mxu0 0
        %1319 = vmatprep.mubr.bf16.mxu0 0
        %1320 = vmatmul.mubr.bf16.gmra.mrb[0].mxu0 %v1285
        %v1321 = vpop.f32.mrb[0].mxu0
        %v1322 = vadd.f32 %v1257, %v1321
        %v1323 = vpop.f32.mrb[0].mxu0
        %v1324 = vpop.f32.mrb[0].mxu0
        %v1325 = vpop.f32.mrb[0].mxu0
        %1326 = vdwg.mxu0
        %v1327 = vadd.f32 %v1188, %v1322
        %v1328 = vsel %vm595, %v1327, 0.0
        %1329 = vadd.xlane.f32.xlu0 %v1328
        %v1330 = vpop.xlane.xlu0 %1329
        %v1331 = vmul.f32 %v1330, %v1164
        %v1332 = vsub.f32 %v1327, %v1331
        %v1333 = vmul.f32 %v1332, %v1332
        %v1334 = vsel %vm595, %v1333, 0.0
        %1335 = vadd.xlane.f32.xlu0 %v1334
        %v1336 = vpop.xlane.xlu0 %1335
        %v1337 = vmul.f32 %v1336, %v1164
        %v1338 = vadd.f32 %v1337, 1e-05
        %v1339 = vrsqrt.pop %v1338
        %v1340 = vmul.f32 %v1332, %v1339
        %v1342 = vlaneseq
        %v1343 = vshrl.u32 %v1342, 7
        %v1344 = vsub.s32 0, %v1343
        %v1345 = vrot.slane %v574, %v1344
        %v1347 = vmul.f32 %v1340, %v1345
        %v1349 = vlaneseq
        %v1350 = vshrl.u32 %v1349, 7
        %v1351 = vsub.s32 0, %v1350
        %v1352 = vrot.slane %v575, %v1351
        %v1354 = vadd.f32 %v1347, %v1352
        %v1355 = vpack.c.bf16 %v1354, %v1354
        %v1357 = vsel %vm595, %v1355, 0
        %1359 = vmatprep.subr.bf16.mxu0 0
        %1360 = vmatpush1.bf16.msra.mxu0 %v591
        %1361 = vmatprep.subr.bf16.mxu0 0
        %1362 = vmatpush1.bf16.msra.mxu0 %v592
        %1363 = vmatprep.subr.bf16.mxu0 0
        %1364 = vmatpush1.bf16.msra.mxu0 0
        %1365 = vmatprep.subr.bf16.mxu0 0
        %1366 = vmatpush1.bf16.msra.mxu0 0
        %1367 = vmatprep.subr.bf16.mxu0 0
        %1368 = vmatpush1.bf16.msra.mxu0 0
        %1369 = vmatprep.subr.bf16.mxu0 0
        %1370 = vmatpush1.bf16.msra.mxu0 0
        %1371 = vmatprep.subr.bf16.mxu0 0
        %1372 = vmatpush1.bf16.msra.mxu0 0
        %1373 = vmatprep.subr.bf16.mxu0 0
        %1374 = vmatpush1.bf16.msra.mxu0 0
        %1375 = vmatprep.subr.bf16.mxu0 0
        %1376 = vmatpush1.bf16.msra.mxu0 0
        %1377 = vmatprep.subr.bf16.mxu0 0
        %1378 = vmatpush1.bf16.msra.mxu0 0
        %1379 = vmatprep.subr.bf16.mxu0 0
        %1380 = vmatpush1.bf16.msra.mxu0 0
        %1381 = vmatprep.subr.bf16.mxu0 0
        %1382 = vmatpush1.bf16.msra.mxu0 0
        %1383 = vmatprep.subr.bf16.mxu0 0
        %1384 = vmatpush1.bf16.msra.mxu0 0
        %1385 = vmatprep.subr.bf16.mxu0 0
        %1386 = vmatpush1.bf16.msra.mxu0 0
        %1387 = vmatprep.subr.bf16.mxu0 0
        %1388 = vmatpush1.bf16.msra.mxu0 0
        %1389 = vmatprep.subr.bf16.mxu0 0
        %1390 = vmatpush1.bf16.msra.mxu0 0
        %1391 = vmatprep.mubr.bf16.mxu0 0
        %1392 = vmatmul.mubr.bf16.gmra.mrb[0].mxu0 %v1357
        %v1393 = vpop.f32.mrb[0].mxu0
        %v1394 = vadd.f32 %v581, %v1393
        %v1395 = vpop.f32.mrb[0].mxu0
        %v1396 = vpop.f32.mrb[0].mxu0
        %v1397 = vpop.f32.mrb[0].mxu0
        %1398 = vdwg.mxu0
        %v1399 = vpack.c.bf16 %v1394, %v1394
        %1401 = vrot.lane.b32.xlu0 %v1399, 96
        %v1402 = vpop.permute.xlu0 %1401
        %v1404 = vsel %vm643, %v1399, 0
        %v1407 = vsel %vm643, %v1402, 0
        %1409 = vmatprep.subr.bf16.mxu0 0
        %1410 = vmatpush1.bf16.xpose.msra.mxu0 %v1407
        %1411 = vmatprep.subr.bf16.mxu0 0
        %1412 = vmatpush1.bf16.xpose.msra.mxu0 0
        %1413 = vmatprep.subr.bf16.mxu0 0
        %1414 = vmatpush1.bf16.xpose.msra.mxu0 0
        %1415 = vmatprep.subr.bf16.mxu0 0
        %1416 = vmatpush1.bf16.xpose.msra.mxu0 0
        %1417 = vmatprep.subr.bf16.mxu0 0
        %1418 = vmatpush1.bf16.xpose.msra.mxu0 0
        %1419 = vmatprep.subr.bf16.mxu0 0
        %1420 = vmatpush1.bf16.xpose.msra.mxu0 0
        %1421 = vmatprep.subr.bf16.mxu0 0
        %1422 = vmatpush1.bf16.xpose.msra.mxu0 0
        %1423 = vmatprep.subr.bf16.mxu0 0
        %1424 = vmatpush1.bf16.xpose.msra.mxu0 0
        %1425 = vmatprep.subr.bf16.mxu0 0
        %1426 = vmatpush1.bf16.xpose.msra.mxu0 0
        %1427 = vmatprep.subr.bf16.mxu0 0
        %1428 = vmatpush1.bf16.xpose.msra.mxu0 0
        %1429 = vmatprep.subr.bf16.mxu0 0
        %1430 = vmatpush1.bf16.xpose.msra.mxu0 0
        %1431 = vmatprep.subr.bf16.mxu0 0
        %1432 = vmatpush1.bf16.xpose.msra.mxu0 0
        %1433 = vmatprep.subr.bf16.mxu0 0
        %1434 = vmatpush1.bf16.xpose.msra.mxu0 0
        %1435 = vmatprep.subr.bf16.mxu0 0
        %1436 = vmatpush1.bf16.xpose.msra.mxu0 0
        %1437 = vmatprep.subr.bf16.mxu0 0
        %1438 = vmatpush1.bf16.xpose.msra.mxu0 0
        %1439 = vmatprep.subr.bf16.mxu0 0
        %1440 = vmatpush1.bf16.xpose.msra.mxu0 0
        %1441 = vmatprep.mubr.bf16.mxu0 0
        %1442 = vmatmul.mubr.bf16.gmra.mrb[0].mxu0 %v1404
        %v1443 = vpop.f32.mrb[0].mxu0
        %v1444 = vadd.f32 %v547, %v1443
        %v1445 = vpop.f32.mrb[0].mxu0
        %v1446 = vpop.f32.mrb[0].mxu0
        %v1447 = vpop.f32.mrb[0].mxu0
        %1448 = vdwg.mxu0
        %v1449 = vsel %vm643, %v1444, -inf
        %1450 = vmax.xlane.f32.xlu0 %v1449
        %v1451 = vpop.xlane.xlu0 %1450
        %v1452 = vsub.f32 %v1444, %v1451
        %v1453 = vmul.f32 %v1452, 1.442695
        %v1454 = vpow.pop %v1453
        %v1455 = vsel %vm643, %v1454, 0.0
        %1456 = vadd.xlane.f32.xlu0 %v1455
        %v1457 = vpop.xlane.xlu0 %1456
        %v1458 = vrcp.pop %v1457
        %v1459 = vmul.f32 %v1454, %v1458
        %v1460 = vpack.c.bf16 %v1459, %v1459
        %1461 = vrot.lane.b32.xlu0 %v1399, 64
        %v1462 = vpop.permute.xlu0 %1461
        %v1464 = vsel %vm643, %v1460, 0
        %v1467 = vsel %vm707, %v1462, 0
        %1469 = vmatprep.subr.bf16.mxu0 0
        %1470 = vmatpush1.bf16.msra.mxu0 %v1467
        %1471 = vmatprep.subr.bf16.mxu0 0
        %1472 = vmatpush1.bf16.msra.mxu0 0
        %1473 = vmatprep.subr.bf16.mxu0 0
        %1474 = vmatpush1.bf16.msra.mxu0 0
        %1475 = vmatprep.subr.bf16.mxu0 0
        %1476 = vmatpush1.bf16.msra.mxu0 0
        %1477 = vmatprep.subr.bf16.mxu0 0
        %1478 = vmatpush1.bf16.msra.mxu0 0
        %1479 = vmatprep.subr.bf16.mxu0 0
        %1480 = vmatpush1.bf16.msra.mxu0 0
        %1481 = vmatprep.subr.bf16.mxu0 0
        %1482 = vmatpush1.bf16.msra.mxu0 0
        %1483 = vmatprep.subr.bf16.mxu0 0
        %1484 = vmatpush1.bf16.msra.mxu0 0
        %1485 = vmatprep.subr.bf16.mxu0 0
        %1486 = vmatpush1.bf16.msra.mxu0 0
        %1487 = vmatprep.subr.bf16.mxu0 0
        %1488 = vmatpush1.bf16.msra.mxu0 0
        %1489 = vmatprep.subr.bf16.mxu0 0
        %1490 = vmatpush1.bf16.msra.mxu0 0
        %1491 = vmatprep.subr.bf16.mxu0 0
        %1492 = vmatpush1.bf16.msra.mxu0 0
        %1493 = vmatprep.subr.bf16.mxu0 0
        %1494 = vmatpush1.bf16.msra.mxu0 0
        %1495 = vmatprep.subr.bf16.mxu0 0
        %1496 = vmatpush1.bf16.msra.mxu0 0
        %1497 = vmatprep.subr.bf16.mxu0 0
        %1498 = vmatpush1.bf16.msra.mxu0 0
        %1499 = vmatprep.subr.bf16.mxu0 0
        %1500 = vmatpush1.bf16.msra.mxu0 0
        %1501 = vmatprep.mubr.bf16.mxu0 0
        %1502 = vmatmul.mubr.bf16.gmra.mrb[0].mxu0 %v1464
        %v1503 = vpop.f32.mrb[0].mxu0
        %v1504 = vadd.f32 0.0, %v1503
        %v1505 = vpop.f32.mrb[0].mxu0
        %v1506 = vpop.f32.mrb[0].mxu0
        %v1507 = vpop.f32.mrb[0].mxu0
        %1508 = vdwg.mxu0
        %1509 = vrot.lane.b32.xlu0 %v1399, 120
        %v1510 = vpop.permute.xlu0 %1509
        %1511 = vrot.lane.b32.xlu0 %v1399, 88
        %v1512 = vpop.permute.xlu0 %1511
        %v1514 = vsel %vm643, %v1510, 0
        %v1517 = vsel %vm643, %v1512, 0
        %1519 = vmatprep.subr.bf16.mxu0 0
        %1520 = vmatpush1.bf16.xpose.msra.mxu0 %v1517
        %1521 = vmatprep.subr.bf16.mxu0 0
        %1522 = vmatpush1.bf16.xpose.msra.mxu0 0
        %1523 = vmatprep.subr.bf16.mxu0 0
        %1524 = vmatpush1.bf16.xpose.msra.mxu0 0
        %1525 = vmatprep.subr.bf16.mxu0 0
        %1526 = vmatpush1.bf16.xpose.msra.mxu0 0
        %1527 = vmatprep.subr.bf16.mxu0 0
        %1528 = vmatpush1.bf16.xpose.msra.mxu0 0
        %1529 = vmatprep.subr.bf16.mxu0 0
        %1530 = vmatpush1.bf16.xpose.msra.mxu0 0
        %1531 = vmatprep.subr.bf16.mxu0 0
        %1532 = vmatpush1.bf16.xpose.msra.mxu0 0
        %1533 = vmatprep.subr.bf16.mxu0 0
        %1534 = vmatpush1.bf16.xpose.msra.mxu0 0
        %1535 = vmatprep.subr.bf16.mxu0 0
        %1536 = vmatpush1.bf16.xpose.msra.mxu0 0
        %1537 = vmatprep.subr.bf16.mxu0 0
        %1538 = vmatpush1.bf16.xpose.msra.mxu0 0
        %1539 = vmatprep.subr.bf16.mxu0 0
        %1540 = vmatpush1.bf16.xpose.msra.mxu0 0
        %1541 = vmatprep.subr.bf16.mxu0 0
        %1542 = vmatpush1.bf16.xpose.msra.mxu0 0
        %1543 = vmatprep.subr.bf16.mxu0 0
        %1544 = vmatpush1.bf16.xpose.msra.mxu0 0
        %1545 = vmatprep.subr.bf16.mxu0 0
        %1546 = vmatpush1.bf16.xpose.msra.mxu0 0
        %1547 = vmatprep.subr.bf16.mxu0 0
        %1548 = vmatpush1.bf16.xpose.msra.mxu0 0
        %1549 = vmatprep.subr.bf16.mxu0 0
        %1550 = vmatpush1.bf16.xpose.msra.mxu0 0
        %1551 = vmatprep.mubr.bf16.mxu0 0
        %1552 = vmatmul.mubr.bf16.gmra.mrb[0].mxu0 %v1514
        %v1553 = vpop.f32.mrb[0].mxu0
        %v1554 = vadd.f32 %v547, %v1553
        %v1555 = vpop.f32.mrb[0].mxu0
        %v1556 = vpop.f32.mrb[0].mxu0
        %v1557 = vpop.f32.mrb[0].mxu0
        %1558 = vdwg.mxu0
        %v1559 = vsel %vm643, %v1554, -inf
        %1560 = vmax.xlane.f32.xlu0 %v1559
        %v1561 = vpop.xlane.xlu0 %1560
        %v1562 = vsub.f32 %v1554, %v1561
        %v1563 = vmul.f32 %v1562, 1.442695
        %v1564 = vpow.pop %v1563
        %v1565 = vsel %vm643, %v1564, 0.0
        %1566 = vadd.xlane.f32.xlu0 %v1565
        %v1567 = vpop.xlane.xlu0 %1566
        %v1568 = vrcp.pop %v1567
        %v1569 = vmul.f32 %v1564, %v1568
        %v1570 = vpack.c.bf16 %v1569, %v1569
        %1571 = vrot.lane.b32.xlu0 %v1399, 56
        %v1572 = vpop.permute.xlu0 %1571
        %v1574 = vsel %vm643, %v1570, 0
        %v1577 = vsel %vm707, %v1572, 0
        %1579 = vmatprep.subr.bf16.mxu0 0
        %1580 = vmatpush1.bf16.msra.mxu0 %v1577
        %1581 = vmatprep.subr.bf16.mxu0 0
        %1582 = vmatpush1.bf16.msra.mxu0 0
        %1583 = vmatprep.subr.bf16.mxu0 0
        %1584 = vmatpush1.bf16.msra.mxu0 0
        %1585 = vmatprep.subr.bf16.mxu0 0
        %1586 = vmatpush1.bf16.msra.mxu0 0
        %1587 = vmatprep.subr.bf16.mxu0 0
        %1588 = vmatpush1.bf16.msra.mxu0 0
        %1589 = vmatprep.subr.bf16.mxu0 0
        %1590 = vmatpush1.bf16.msra.mxu0 0
        %1591 = vmatprep.subr.bf16.mxu0 0
        %1592 = vmatpush1.bf16.msra.mxu0 0
        %1593 = vmatprep.subr.bf16.mxu0 0
        %1594 = vmatpush1.bf16.msra.mxu0 0
        %1595 = vmatprep.subr.bf16.mxu0 0
        %1596 = vmatpush1.bf16.msra.mxu0 0
        %1597 = vmatprep.subr.bf16.mxu0 0
        %1598 = vmatpush1.bf16.msra.mxu0 0
        %1599 = vmatprep.subr.bf16.mxu0 0
        %1600 = vmatpush1.bf16.msra.mxu0 0
        %1601 = vmatprep.subr.bf16.mxu0 0
        %1602 = vmatpush1.bf16.msra.mxu0 0
        %1603 = vmatprep.subr.bf16.mxu0 0
        %1604 = vmatpush1.bf16.msra.mxu0 0
        %1605 = vmatprep.subr.bf16.mxu0 0
        %1606 = vmatpush1.bf16.msra.mxu0 0
        %1607 = vmatprep.subr.bf16.mxu0 0
        %1608 = vmatpush1.bf16.msra.mxu0 0
        %1609 = vmatprep.subr.bf16.mxu0 0
        %1610 = vmatpush1.bf16.msra.mxu0 0
        %1611 = vmatprep.mubr.bf16.mxu0 0
        %1612 = vmatmul.mubr.bf16.gmra.mrb[0].mxu0 %v1574
        %v1613 = vpop.f32.mrb[0].mxu0
        %v1614 = vadd.f32 0.0, %v1613
        %v1615 = vpop.f32.mrb[0].mxu0
        %v1616 = vpop.f32.mrb[0].mxu0
        %v1617 = vpop.f32.mrb[0].mxu0
        %1618 = vdwg.mxu0
        %1619 = vrot.lane.b32.xlu0 %v1399, 112
        %v1620 = vpop.permute.xlu0 %1619
        %1621 = vrot.lane.b32.xlu0 %v1399, 80
        %v1622 = vpop.permute.xlu0 %1621
        %v1624 = vsel %vm643, %v1620, 0
        %v1627 = vsel %vm643, %v1622, 0
        %1629 = vmatprep.subr.bf16.mxu0 0
        %1630 = vmatpush1.bf16.xpose.msra.mxu0 %v1627
        %1631 = vmatprep.subr.bf16.mxu0 0
        %1632 = vmatpush1.bf16.xpose.msra.mxu0 0
        %1633 = vmatprep.subr.bf16.mxu0 0
        %1634 = vmatpush1.bf16.xpose.msra.mxu0 0
        %1635 = vmatprep.subr.bf16.mxu0 0
        %1636 = vmatpush1.bf16.xpose.msra.mxu0 0
        %1637 = vmatprep.subr.bf16.mxu0 0
        %1638 = vmatpush1.bf16.xpose.msra.mxu0 0
        %1639 = vmatprep.subr.bf16.mxu0 0
        %1640 = vmatpush1.bf16.xpose.msra.mxu0 0
        %1641 = vmatprep.subr.bf16.mxu0 0
        %1642 = vmatpush1.bf16.xpose.msra.mxu0 0
        %1643 = vmatprep.subr.bf16.mxu0 0
        %1644 = vmatpush1.bf16.xpose.msra.mxu0 0
        %1645 = vmatprep.subr.bf16.mxu0 0
        %1646 = vmatpush1.bf16.xpose.msra.mxu0 0
        %1647 = vmatprep.subr.bf16.mxu0 0
        %1648 = vmatpush1.bf16.xpose.msra.mxu0 0
        %1649 = vmatprep.subr.bf16.mxu0 0
        %1650 = vmatpush1.bf16.xpose.msra.mxu0 0
        %1651 = vmatprep.subr.bf16.mxu0 0
        %1652 = vmatpush1.bf16.xpose.msra.mxu0 0
        %1653 = vmatprep.subr.bf16.mxu0 0
        %1654 = vmatpush1.bf16.xpose.msra.mxu0 0
        %1655 = vmatprep.subr.bf16.mxu0 0
        %1656 = vmatpush1.bf16.xpose.msra.mxu0 0
        %1657 = vmatprep.subr.bf16.mxu0 0
        %1658 = vmatpush1.bf16.xpose.msra.mxu0 0
        %1659 = vmatprep.subr.bf16.mxu0 0
        %1660 = vmatpush1.bf16.xpose.msra.mxu0 0
        %1661 = vmatprep.mubr.bf16.mxu0 0
        %1662 = vmatmul.mubr.bf16.gmra.mrb[0].mxu0 %v1624
        %v1663 = vpop.f32.mrb[0].mxu0
        %v1664 = vadd.f32 %v547, %v1663
        %v1665 = vpop.f32.mrb[0].mxu0
        %v1666 = vpop.f32.mrb[0].mxu0
        %v1667 = vpop.f32.mrb[0].mxu0
        %1668 = vdwg.mxu0
        %v1669 = vsel %vm643, %v1664, -inf
        %1670 = vmax.xlane.f32.xlu0 %v1669
        %v1671 = vpop.xlane.xlu0 %1670
        %v1672 = vsub.f32 %v1664, %v1671
        %v1673 = vmul.f32 %v1672, 1.442695
        %v1674 = vpow.pop %v1673
        %v1675 = vsel %vm643, %v1674, 0.0
        %1676 = vadd.xlane.f32.xlu0 %v1675
        %v1677 = vpop.xlane.xlu0 %1676
        %v1678 = vrcp.pop %v1677
        %v1679 = vmul.f32 %v1674, %v1678
        %v1680 = vpack.c.bf16 %v1679, %v1679
        %1681 = vrot.lane.b32.xlu0 %v1399, 48
        %v1682 = vpop.permute.xlu0 %1681
        %v1684 = vsel %vm643, %v1680, 0
        %v1687 = vsel %vm707, %v1682, 0
        %1689 = vmatprep.subr.bf16.mxu0 0
        %1690 = vmatpush1.bf16.msra.mxu0 %v1687
        %1691 = vmatprep.subr.bf16.mxu0 0
        %1692 = vmatpush1.bf16.msra.mxu0 0
        %1693 = vmatprep.subr.bf16.mxu0 0
        %1694 = vmatpush1.bf16.msra.mxu0 0
        %1695 = vmatprep.subr.bf16.mxu0 0
        %1696 = vmatpush1.bf16.msra.mxu0 0
        %1697 = vmatprep.subr.bf16.mxu0 0
        %1698 = vmatpush1.bf16.msra.mxu0 0
        %1699 = vmatprep.subr.bf16.mxu0 0
        %1700 = vmatpush1.bf16.msra.mxu0 0
        %1701 = vmatprep.subr.bf16.mxu0 0
        %1702 = vmatpush1.bf16.msra.mxu0 0
        %1703 = vmatprep.subr.bf16.mxu0 0
        %1704 = vmatpush1.bf16.msra.mxu0 0
        %1705 = vmatprep.subr.bf16.mxu0 0
        %1706 = vmatpush1.bf16.msra.mxu0 0
        %1707 = vmatprep.subr.bf16.mxu0 0
        %1708 = vmatpush1.bf16.msra.mxu0 0
        %1709 = vmatprep.subr.bf16.mxu0 0
        %1710 = vmatpush1.bf16.msra.mxu0 0
        %1711 = vmatprep.subr.bf16.mxu0 0
        %1712 = vmatpush1.bf16.msra.mxu0 0
        %1713 = vmatprep.subr.bf16.mxu0 0
        %1714 = vmatpush1.bf16.msra.mxu0 0
        %1715 = vmatprep.subr.bf16.mxu0 0
        %1716 = vmatpush1.bf16.msra.mxu0 0
        %1717 = vmatprep.subr.bf16.mxu0 0
        %1718 = vmatpush1.bf16.msra.mxu0 0
        %1719 = vmatprep.subr.bf16.mxu0 0
        %1720 = vmatpush1.bf16.msra.mxu0 0
        %1721 = vmatprep.mubr.bf16.mxu0 0
        %1722 = vmatmul.mubr.bf16.gmra.mrb[0].mxu0 %v1684
        %v1723 = vpop.f32.mrb[0].mxu0
        %v1724 = vadd.f32 0.0, %v1723
        %v1725 = vpop.f32.mrb[0].mxu0
        %v1726 = vpop.f32.mrb[0].mxu0
        %v1727 = vpop.f32.mrb[0].mxu0
        %1728 = vdwg.mxu0
        %1729 = vrot.lane.b32.xlu0 %v1399, 104
        %v1730 = vpop.permute.xlu0 %1729
        %1731 = vrot.lane.b32.xlu0 %v1399, 72
        %v1732 = vpop.permute.xlu0 %1731
        %v1734 = vsel %vm643, %v1730, 0
        %v1737 = vsel %vm643, %v1732, 0
        %1739 = vmatprep.subr.bf16.mxu0 0
        %1740 = vmatpush1.bf16.xpose.msra.mxu0 %v1737
        %1741 = vmatprep.subr.bf16.mxu0 0
        %1742 = vmatpush1.bf16.xpose.msra.mxu0 0
        %1743 = vmatprep.subr.bf16.mxu0 0
        %1744 = vmatpush1.bf16.xpose.msra.mxu0 0
        %1745 = vmatprep.subr.bf16.mxu0 0
        %1746 = vmatpush1.bf16.xpose.msra.mxu0 0
        %1747 = vmatprep.subr.bf16.mxu0 0
        %1748 = vmatpush1.bf16.xpose.msra.mxu0 0
        %1749 = vmatprep.subr.bf16.mxu0 0
        %1750 = vmatpush1.bf16.xpose.msra.mxu0 0
        %1751 = vmatprep.subr.bf16.mxu0 0
        %1752 = vmatpush1.bf16.xpose.msra.mxu0 0
        %1753 = vmatprep.subr.bf16.mxu0 0
        %1754 = vmatpush1.bf16.xpose.msra.mxu0 0
        %1755 = vmatprep.subr.bf16.mxu0 0
        %1756 = vmatpush1.bf16.xpose.msra.mxu0 0
        %1757 = vmatprep.subr.bf16.mxu0 0
        %1758 = vmatpush1.bf16.xpose.msra.mxu0 0
        %1759 = vmatprep.subr.bf16.mxu0 0
        %1760 = vmatpush1.bf16.xpose.msra.mxu0 0
        %1761 = vmatprep.subr.bf16.mxu0 0
        %1762 = vmatpush1.bf16.xpose.msra.mxu0 0
        %1763 = vmatprep.subr.bf16.mxu0 0
        %1764 = vmatpush1.bf16.xpose.msra.mxu0 0
        %1765 = vmatprep.subr.bf16.mxu0 0
        %1766 = vmatpush1.bf16.xpose.msra.mxu0 0
        %1767 = vmatprep.subr.bf16.mxu0 0
        %1768 = vmatpush1.bf16.xpose.msra.mxu0 0
        %1769 = vmatprep.subr.bf16.mxu0 0
        %1770 = vmatpush1.bf16.xpose.msra.mxu0 0
        %1771 = vmatprep.mubr.bf16.mxu0 0
        %1772 = vmatmul.mubr.bf16.gmra.mrb[0].mxu0 %v1734
        %v1773 = vpop.f32.mrb[0].mxu0
        %v1774 = vadd.f32 %v547, %v1773
        %v1775 = vpop.f32.mrb[0].mxu0
        %v1776 = vpop.f32.mrb[0].mxu0
        %v1777 = vpop.f32.mrb[0].mxu0
        %1778 = vdwg.mxu0
        %v1779 = vsel %vm643, %v1774, -inf
        %1780 = vmax.xlane.f32.xlu0 %v1779
        %v1781 = vpop.xlane.xlu0 %1780
        %v1782 = vsub.f32 %v1774, %v1781
        %v1783 = vmul.f32 %v1782, 1.442695
        %v1784 = vpow.pop %v1783
        %v1785 = vsel %vm643, %v1784, 0.0
        %1786 = vadd.xlane.f32.xlu0 %v1785
        %v1787 = vpop.xlane.xlu0 %1786
        %v1788 = vrcp.pop %v1787
        %v1789 = vmul.f32 %v1784, %v1788
        %v1790 = vpack.c.bf16 %v1789, %v1789
        %1791 = vrot.lane.b32.xlu0 %v1399, 40
        %v1792 = vpop.permute.xlu0 %1791
        %v1794 = vsel %vm643, %v1790, 0
        %v1797 = vsel %vm707, %v1792, 0
        %1799 = vmatprep.subr.bf16.mxu0 0
        %1800 = vmatpush1.bf16.msra.mxu0 %v1797
        %1801 = vmatprep.subr.bf16.mxu0 0
        %1802 = vmatpush1.bf16.msra.mxu0 0
        %1803 = vmatprep.subr.bf16.mxu0 0
        %1804 = vmatpush1.bf16.msra.mxu0 0
        %1805 = vmatprep.subr.bf16.mxu0 0
        %1806 = vmatpush1.bf16.msra.mxu0 0
        %1807 = vmatprep.subr.bf16.mxu0 0
        %1808 = vmatpush1.bf16.msra.mxu0 0
        %1809 = vmatprep.subr.bf16.mxu0 0
        %1810 = vmatpush1.bf16.msra.mxu0 0
        %1811 = vmatprep.subr.bf16.mxu0 0
        %1812 = vmatpush1.bf16.msra.mxu0 0
        %1813 = vmatprep.subr.bf16.mxu0 0
        %1814 = vmatpush1.bf16.msra.mxu0 0
        %1815 = vmatprep.subr.bf16.mxu0 0
        %1816 = vmatpush1.bf16.msra.mxu0 0
        %1817 = vmatprep.subr.bf16.mxu0 0
        %1818 = vmatpush1.bf16.msra.mxu0 0
        %1819 = vmatprep.subr.bf16.mxu0 0
        %1820 = vmatpush1.bf16.msra.mxu0 0
        %1821 = vmatprep.subr.bf16.mxu0 0
        %1822 = vmatpush1.bf16.msra.mxu0 0
        %1823 = vmatprep.subr.bf16.mxu0 0
        %1824 = vmatpush1.bf16.msra.mxu0 0
        %1825 = vmatprep.subr.bf16.mxu0 0
        %1826 = vmatpush1.bf16.msra.mxu0 0
        %1827 = vmatprep.subr.bf16.mxu0 0
        %1828 = vmatpush1.bf16.msra.mxu0 0
        %1829 = vmatprep.subr.bf16.mxu0 0
        %1830 = vmatpush1.bf16.msra.mxu0 0
        %1831 = vmatprep.mubr.bf16.mxu0 0
        %1832 = vmatmul.mubr.bf16.gmra.mrb[0].mxu0 %v1794
        %v1833 = vpop.f32.mrb[0].mxu0
        %v1834 = vadd.f32 0.0, %v1833
        %v1835 = vpop.f32.mrb[0].mxu0
        %v1836 = vpop.f32.mrb[0].mxu0
        %v1837 = vpop.f32.mrb[0].mxu0
        %1838 = vdwg.mxu0
        %1840 = vrot.lane.b32.xlu0 %v1614, 8
        %v1841 = vpop.permute.xlu0 %1840
        %1844 = vrot.lane.b32.xlu0 %v1724, 16
        %v1845 = vpop.permute.xlu0 %1844
        %1848 = vrot.lane.b32.xlu0 %v1834, 24
        %v1849 = vpop.permute.xlu0 %1848
        %v1851 = vsel %vm643, %v1504, %v1841
        %v1852 = vsel %vm1094, %v1851, %v1845
        %v1853 = vsel %vm1096, %v1852, %v1849
        %v1854 = vpack.c.bf16 %v1853, %v1853
        %v1856 = vsel %vm595, %v1854, 0
        %1858 = vmatprep.subr.bf16.mxu0 0
        %1859 = vmatpush1.bf16.msra.mxu0 %v1113
        %1860 = vmatprep.subr.bf16.mxu0 0
        %1861 = vmatpush1.bf16.msra.mxu0 %v1114
        %1862 = vmatprep.subr.bf16.mxu0 0
        %1863 = vmatpush1.bf16.msra.mxu0 0
        %1864 = vmatprep.subr.bf16.mxu0 0
        %1865 = vmatpush1.bf16.msra.mxu0 0
        %1866 = vmatprep.subr.bf16.mxu0 0
        %1867 = vmatpush1.bf16.msra.mxu0 0
        %1868 = vmatprep.subr.bf16.mxu0 0
        %1869 = vmatpush1.bf16.msra.mxu0 0
        %1870 = vmatprep.subr.bf16.mxu0 0
        %1871 = vmatpush1.bf16.msra.mxu0 0
        %1872 = vmatprep.subr.bf16.mxu0 0
        %1873 = vmatpush1.bf16.msra.mxu0 0
        %1874 = vmatprep.subr.bf16.mxu0 0
        %1875 = vmatpush1.bf16.msra.mxu0 0
        %1876 = vmatprep.subr.bf16.mxu0 0
        %1877 = vmatpush1.bf16.msra.mxu0 0
        %1878 = vmatprep.subr.bf16.mxu0 0
        %1879 = vmatpush1.bf16.msra.mxu0 0
        %1880 = vmatprep.subr.bf16.mxu0 0
        %1881 = vmatpush1.bf16.msra.mxu0 0
        %1882 = vmatprep.subr.bf16.mxu0 0
        %1883 = vmatpush1.bf16.msra.mxu0 0
        %1884 = vmatprep.subr.bf16.mxu0 0
        %1885 = vmatpush1.bf16.msra.mxu0 0
        %1886 = vmatprep.subr.bf16.mxu0 0
        %1887 = vmatpush1.bf16.msra.mxu0 0
        %1888 = vmatprep.subr.bf16.mxu0 0
        %1889 = vmatpush1.bf16.msra.mxu0 0
        %1890 = vmatprep.mubr.bf16.mxu0 0
        %1891 = vmatmul.mubr.bf16.gmra.mrb[0].mxu0 %v1856
        %v1892 = vpop.f32.mrb[0].mxu0
        %v1893 = vadd.f32 %v1103, %v1892
        %v1894 = vpop.f32.mrb[0].mxu0
        %v1895 = vpop.f32.mrb[0].mxu0
        %v1896 = vpop.f32.mrb[0].mxu0
        %1897 = vdwg.mxu0
        %v1898 = vadd.f32 %v1354, %v1893
        %v1899 = vsel %vm595, %v1898, 0.0
        %1900 = vadd.xlane.f32.xlu0 %v1899
        %v1901 = vpop.xlane.xlu0 %1900
        %v1902 = vmul.f32 %v1901, %v1164
        %v1903 = vsub.f32 %v1898, %v1902
        %v1904 = vmul.f32 %v1903, %v1903
        %v1905 = vsel %vm595, %v1904, 0.0
        %1906 = vadd.xlane.f32.xlu0 %v1905
        %v1907 = vpop.xlane.xlu0 %1906
        %v1908 = vmul.f32 %v1907, %v1164
        %v1909 = vadd.f32 %v1908, 1e-05
        %v1910 = vrsqrt.pop %v1909
        %v1911 = vmul.f32 %v1903, %v1910
        %v1912 = vmul.f32 %v1911, %v1179
        %v1913 = vadd.f32 %v1912, %v1186
        %v1914 = vpack.c.bf16 %v1913, %v1913
        %v1916 = vsel %vm595, %v1914, 0
        %1918 = vmatprep.subr.bf16.mxu0 0
        %1919 = vmatpush1.bf16.msra.mxu0 %v1204
        %1920 = vmatprep.subr.bf16.mxu0 0
        %1921 = vmatpush1.bf16.msra.mxu0 %v1205
        %1922 = vmatprep.subr.bf16.mxu0 0
        %1923 = vmatpush1.bf16.msra.mxu0 0
        %1924 = vmatprep.subr.bf16.mxu0 0
        %1925 = vmatpush1.bf16.msra.mxu0 0
        %1926 = vmatprep.subr.bf16.mxu0 0
        %1927 = vmatpush1.bf16.msra.mxu0 0
        %1928 = vmatprep.subr.bf16.mxu0 0
        %1929 = vmatpush1.bf16.msra.mxu0 0
        %1930 = vmatprep.subr.bf16.mxu0 0
        %1931 = vmatpush1.bf16.msra.mxu0 0
        %1932 = vmatprep.subr.bf16.mxu0 0
        %1933 = vmatpush1.bf16.msra.mxu0 0
        %1934 = vmatprep.subr.bf16.mxu0 0
        %1935 = vmatpush1.bf16.msra.mxu0 0
        %1936 = vmatprep.subr.bf16.mxu0 0
        %1937 = vmatpush1.bf16.msra.mxu0 0
        %1938 = vmatprep.subr.bf16.mxu0 0
        %1939 = vmatpush1.bf16.msra.mxu0 0
        %1940 = vmatprep.subr.bf16.mxu0 0
        %1941 = vmatpush1.bf16.msra.mxu0 0
        %1942 = vmatprep.subr.bf16.mxu0 0
        %1943 = vmatpush1.bf16.msra.mxu0 0
        %1944 = vmatprep.subr.bf16.mxu0 0
        %1945 = vmatpush1.bf16.msra.mxu0 0
        %1946 = vmatprep.subr.bf16.mxu0 0
        %1947 = vmatpush1.bf16.msra.mxu0 0
        %1948 = vmatprep.subr.bf16.mxu0 0
        %1949 = vmatpush1.bf16.msra.mxu0 0
        %1950 = vmatprep.mubr.bf16.mxu0 0
        %1951 = vmatmul.mubr.bf16.gmra.mrb[0].mxu0 %v1916
        %v1952 = vpop.f32.mrb[0].mxu0
        %v1953 = vadd.f32 %v1194, %v1952
        %v1954 = vpop.f32.mrb[0].mxu0
        %v1955 = vpop.f32.mrb[0].mxu0
        %v1956 = vpop.f32.mrb[0].mxu0
        %1957 = vdwg.mxu0
        %v1958 = vmax.f32 %v1953, 0.0
        %v1959 = vpack.c.bf16 %v1958, %v1958
        %v1961 = vsel %vm1283, %v1959, 0
        %1963 = vmatprep.subr.bf16.mxu0 0
        %1964 = vmatpush1.bf16.msra.mxu0 %v1275
        %1965 = vmatprep.subr.bf16.mxu0 0
        %1966 = vmatpush1.bf16.msra.mxu0 %v1276
        %1967 = vmatprep.subr.bf16.mxu0 0
        %1968 = vmatpush1.bf16.msra.mxu0 %v1277
        %1969 = vmatprep.subr.bf16.mxu0 0
        %1970 = vmatpush1.bf16.msra.mxu0 %v1278
        %1971 = vmatprep.subr.bf16.mxu0 0
        %1972 = vmatpush1.bf16.msra.mxu0 0
        %1973 = vmatprep.subr.bf16.mxu0 0
        %1974 = vmatpush1.bf16.msra.mxu0 0
        %1975 = vmatprep.subr.bf16.mxu0 0
        %1976 = vmatpush1.bf16.msra.mxu0 0
        %1977 = vmatprep.subr.bf16.mxu0 0
        %1978 = vmatpush1.bf16.msra.mxu0 0
        %1979 = vmatprep.subr.bf16.mxu0 0
        %1980 = vmatpush1.bf16.msra.mxu0 0
        %1981 = vmatprep.subr.bf16.mxu0 0
        %1982 = vmatpush1.bf16.msra.mxu0 0
        %1983 = vmatprep.subr.bf16.mxu0 0
        %1984 = vmatpush1.bf16.msra.mxu0 0
        %1985 = vmatprep.subr.bf16.mxu0 0
        %1986 = vmatpush1.bf16.msra.mxu0 0
        %1987 = vmatprep.subr.bf16.mxu0 0
        %1988 = vmatpush1.bf16.msra.mxu0 0
        %1989 = vmatprep.subr.bf16.mxu0 0
        %1990 = vmatpush1.bf16.msra.mxu0 0
        %1991 = vmatprep.subr.bf16.mxu0 0
        %1992 = vmatpush1.bf16.msra.mxu0 0
        %1993 = vmatprep.subr.bf16.mxu0 0
        %1994 = vmatpush1.bf16.msra.mxu0 0
        %1995 = vmatprep.mubr.bf16.mxu0 0
        %1996 = vmatmul.mubr.bf16.gmra.mrb[0].mxu0 %v1961
        %v1997 = vpop.f32.mrb[0].mxu0
        %v1998 = vadd.f32 %v1257, %v1997
        %v1999 = vpop.f32.mrb[0].mxu0
        %v2000 = vpop.f32.mrb[0].mxu0
        %v2001 = vpop.f32.mrb[0].mxu0
        %2002 = vdwg.mxu0
        %v2003 = vadd.f32 %v1913, %v1998
        %v2004 = vsel %vm595, %v2003, 0.0
        %2005 = vadd.xlane.f32.xlu0 %v2004
        %v2006 = vpop.xlane.xlu0 %2005
        %v2007 = vmul.f32 %v2006, %v1164
        %v2008 = vsub.f32 %v2003, %v2007
        %v2009 = vmul.f32 %v2008, %v2008
        %v2010 = vsel %vm595, %v2009, 0.0
        %2011 = vadd.xlane.f32.xlu0 %v2010
        %v2012 = vpop.xlane.xlu0 %2011
        %v2013 = vmul.f32 %v2012, %v1164
        %v2014 = vadd.f32 %v2013, 1e-05
        %v2015 = vrsqrt.pop %v2014
        %v2016 = vmul.f32 %v2008, %v2015
        %v2017 = vmul.f32 %v2016, %v1345
        %v2018 = vadd.f32 %v2017, %v1352
        %2019 = vst.msk [vmem:[%s536] sm:$0xff] %vm595, %v2018
        %s2020 = sand.u32 %s343, 1
        %s2021 = scalar_lea.sflag [#allocation4], %s2020
        %s2022 = sand.u32 %s343, 1
        %s2023 = smul.addr %s2022, 8
        %s2024 = scalar_lea.vmem [#allocation11], %s2023
        // Predicated region
        $region97: #{tpu_custom_call.1} parent=75 // pred_check
          %p2025 = pneg %p353
        $region98: #{tpu_custom_call.1} parent=75 // pred_check_branch
          %2027 = sbr.rel (%p2025) target = $region100
        $region99: #{tpu_custom_call.1} parent=75 // pred_region
          %s2029 = ssub.s32 128, 128
          %2030 = vsyncadd %s2021, %s2029
          %s2031 = smul.addr %s31, 128
          %s2032 = scalar_lea.hbm %s14, %s2031
          %s2034 = sshll.u32 %s2024, 4
          %s2035 = int_to_ptr.vmem [resolvable:$true] %s2034
          %2037 = dma.vmem_to_hbm [thread:$0]  %s2035, 128, %s2032, %s2021
        $region100: #{tpu_custom_call.1} parent=75 // pred_fallthru
          _
      $region76: #{tpu_custom_call.1} parent=5 // pred_fallthru
        _
      %p2038 = scmp.le.s32.totalorder 2, %s26
      // Predicated region
      $region101: #{tpu_custom_call.1} parent=5 // pred_check
        %p2039 = pneg %p2038
      $region102: #{tpu_custom_call.1} parent=5 // pred_check_branch
        %2041 = sbr.rel (%p2039) target = $region104
      $region103: #{tpu_custom_call.1} parent=5 // pred_region
        %s2042 = ssub.s32 %s26, 2
        // Predicated region
        $region105: #{tpu_custom_call.1} parent=103 // pred_check
          %p2043 = pneg %p359
        $region106: #{tpu_custom_call.1} parent=103 // pred_check_branch
          %2045 = sbr.rel (%p2043) target = $region108
        $region107: #{tpu_custom_call.1} parent=103 // pred_region
          %s2046 = sand.u32 %s344, 1
          %s2047 = scalar_lea.sflag [#allocation4], %s2046
          %s2048 = sand.u32 %s344, 1
          %s2049 = smul.addr %s2048, 8
          %s2050 = scalar_lea.vmem [#allocation11], %s2049
          %2051 = dma.done %s2047, 128
        $region108: #{tpu_custom_call.1} parent=103 // pred_fallthru
          _
      $region104: #{tpu_custom_call.1} parent=5 // pred_fallthru
        _
    $region6: #{tpu_custom_call.1} parent=1 // loop_footer
      %s30 = sadd.s32 1, %s26
    $region7: #{tpu_custom_call.1} parent=1 // loop_footer_branch
      %25 = sbr.rel target = $region3
    $region8: #{tpu_custom_call.1} parent=1 // loop_exit
      _
    %2052 = vsyncpa [#allocation3], 1
    %s2053 = scalar_lea.sflag [#allocation3], 1
    %2054 = vsyncpa %s2053, 1
    %2055 = vsyncpa [#allocation6], 1
    %2056 = vsyncpa [#allocation9], 1
    %2057 = vsyncpa [#allocation4], 1
    %s2058 = scalar_lea.sflag [#allocation4], 1
    %2059 = vsyncpa %s2058, 1

</llo_original>
